<compile_context>
chip_gen: v7x
topology: tpu7x:2x2x1
jax: 0.10.0
libtpu: 0.0.40
codegen_flags: <defaults>
</compile_context>

<pallas_src>
import functools

import jax
import jax.numpy as jnp
from jax.experimental import pallas as pl
from jax.experimental.pallas import tpu as pltpu

# ---------------------------------------------------------------- config ----
B = 8          # batch (fills the 8 f32 sublanes exactly)
D_IN = 16      # input feature dim
H = 32         # latent / hidden dim (logical)
H_PAD = 128    # lane-dense padded hidden dim used inside the kernel
C = 10         # task-head output dim
NUM_STEPS = 8  # ODE solver timesteps (hidden_states.shape[1])
DT = 0.1       # Euler step size


# ---------------------------------------------------------------- kernel ----
def neural_ode_kernel(x_ref, wp_ref, bp_ref, w1_ref, b1_ref, w2_ref, b2_ref,
                      wt_ref, bt_ref, hs_ref, last_ref, logits_ref,
                      *, num_steps, dt):
    """Single-program kernel: pre-solver, unrolled Euler integration, task head.

    hs_ref:     [T, B, H_PAD]  (time-major trajectory, VMEM)
    last_ref:   [B, H_PAD]
    logits_ref: [B, C]
    """
    # --- pre-solver function: Linear + tanh -----------------------------
    # Padded columns of Wp and padded lanes of bp are zero => tanh(0) = 0 in
    # the padding lanes of h.
    h = jnp.tanh(
        jnp.dot(x_ref[...], wp_ref[...], preferred_element_type=jnp.float32)
        + bp_ref[...]
    )

    # --- hoist loop-invariant work out of the per-step body --------------
    dt_f = jnp.float32(dt)
    w1 = w1_ref[...]
    b1 = jnp.broadcast_to(b1_ref[...], h.shape)           # broadcast once
    w2_dt = dt_f * w2_ref[...]                             # fold dt into W2
    b2_dt = jnp.broadcast_to(dt_f * b2_ref[...], h.shape)  # and into b2

    # --- fully-unrolled explicit Euler: h_{t+1} = h_t + dt * f(h_t) ------
    for t in range(num_steps):
        z = jnp.tanh(jnp.dot(h, w1, preferred_element_type=jnp.float32) + b1)
        h = h + (jnp.dot(z, w2_dt, preferred_element_type=jnp.float32) + b2_dt)
        hs_ref[t] = h          # one unmasked (8,128) f32 vreg store per step

    # --- outputs: last hidden state and task head -------------------------
    last_ref[...] = h
    logits_ref[...] = (
        jnp.dot(h, wt_ref[...], preferred_element_type=jnp.float32)
        + bt_ref[...]
    )


# --------------------------------------------------------------- wrapper ----
def _pad_to(a, shape):
    pads = [(0, s - d) for d, s in zip(a.shape, shape)]
    return jnp.pad(a, pads)


@jax.jit
def neural_ode_forward(x, params):
    """Returns (hidden_states [B,T,H], last_hidden [B,H], logits [B,C])."""
    wp, bp, w1, b1, w2, b2, wt, bt = params

    # Zero-pad the hidden dim 32 -> 128 (done once, outside the kernel) so the
    # per-step matmuls and trajectory stores are lane dense.  Zero padding
    # guarantees the padded lanes stay exactly zero through the whole solve.
    wp_p = _pad_to(wp, (D_IN, H_PAD))
    bp_p = _pad_to(bp, (1, H_PAD))
    w1_p = _pad_to(w1, (H_PAD, H_PAD))
    b1_p = _pad_to(b1, (1, H_PAD))
    w2_p = _pad_to(w2, (H_PAD, H_PAD))
    b2_p = _pad_to(b2, (1, H_PAD))
    wt_p = _pad_to(wt, (H_PAD, C))

    kernel = functools.partial(neural_ode_kernel, num_steps=NUM_STEPS, dt=DT)
    vmem = pl.BlockSpec(memory_space=pltpu.MemorySpace.VMEM)
    hs_tbh, last_p, logits = pl.pallas_call(
        kernel,
        out_shape=(
            jax.ShapeDtypeStruct((NUM_STEPS, B, H_PAD), jnp.float32),
            jax.ShapeDtypeStruct((B, H_PAD), jnp.float32),
            jax.ShapeDtypeStruct((B, C), jnp.float32),
        ),
        in_specs=[vmem] * 9,
        out_specs=(vmem, vmem, vmem),
    )(x, wp_p, bp_p, w1_p, b1_p, w2_p, b2_p, wt_p, bt)

    hidden_states = jnp.transpose(hs_tbh, (1, 0, 2))[:, :, :H]   # [B, T, H]
    last_hidden = last_p[:, :H]                                  # [B, H]
    return hidden_states, last_hidden, logits


# -------------------------------------------------------- pure-JAX check ----
def reference_forward(x, params):
    wp, bp, w1, b1, w2, b2, wt, bt = params
    h = jnp.tanh(x @ wp + bp)
    hs = []
    for _ in range(NUM_STEPS):
        z = jnp.tanh(h @ w1 + b1)
        h = h + DT * (z @ w2 + b2)
        hs.append(h)
    hs = jnp.stack(hs, axis=1)                           # [B, T, H]
    logits = hs[:, -1, :] @ wt + bt
    return hs, hs[:, -1, :], logits


# ----------------------------------------------------------------- main -----
if __name__ == "__main__":
    key = jax.random.PRNGKey(0)
    k = jax.random.split(key, 9)

    x = jax.random.normal(k[0], (B, D_IN), dtype=jnp.float32)

    # Deterministic synthetic parameters (biases kept 2D [1, F] for VMEM).
    wp = 0.2 * jax.random.normal(k[1], (D_IN, H), dtype=jnp.float32)
    bp = 0.1 * jax.random.normal(k[2], (1, H), dtype=jnp.float32)
    w1 = 0.2 * jax.random.normal(k[3], (H, H), dtype=jnp.float32)
    b1 = 0.1 * jax.random.normal(k[4], (1, H), dtype=jnp.float32)
    w2 = 0.2 * jax.random.normal(k[5], (H, H), dtype=jnp.float32)
    b2 = 0.1 * jax.random.normal(k[6], (1, H), dtype=jnp.float32)
    wt = 0.2 * jax.random.normal(k[7], (H, C), dtype=jnp.float32)
    bt = 0.1 * jax.random.normal(k[8], (1, C), dtype=jnp.float32)
    params = (wp, bp, w1, b1, w2, b2, wt, bt)

    hs, last, logits = jax.block_until_ready(neural_ode_forward(x, params))
    hs_r, last_r, logits_r = reference_forward(x, params)

    assert hs.shape == (B, NUM_STEPS, H)
    assert last.shape == (B, H)
    assert logits.shape == (B, C)
    assert jnp.allclose(hs, hs_r, atol=1e-5, rtol=1e-5)
    assert jnp.allclose(last, last_r, atol=1e-5, rtol=1e-5)
    assert jnp.allclose(logits, logits_r, atol=1e-5, rtol=1e-5)

    print("KERNEL_OK")
</pallas_src>

<mosaic_0001>
module attributes {stable_mosaic.version = 11 : i64} {
  func.func @neural_ode_kernel(%arg0: memref<8x16xf32, #tpu.memory_space<vmem>>, %arg1: memref<16x128xf32, #tpu.memory_space<vmem>>, %arg2: memref<1x128xf32, #tpu.memory_space<vmem>>, %arg3: memref<128x128xf32, #tpu.memory_space<vmem>>, %arg4: memref<1x128xf32, #tpu.memory_space<vmem>>, %arg5: memref<128x128xf32, #tpu.memory_space<vmem>>, %arg6: memref<1x128xf32, #tpu.memory_space<vmem>>, %arg7: memref<128x10xf32, #tpu.memory_space<vmem>>, %arg8: memref<1x10xf32, #tpu.memory_space<vmem>>, %arg9: memref<8x8x128xf32, #tpu.memory_space<vmem>>, %arg10: memref<8x128xf32, #tpu.memory_space<vmem>>, %arg11: memref<8x10xf32, #tpu.memory_space<vmem>>) attributes {dimension_semantics = [], scalar_prefetch = 0 : i64, scratch_operands = 0 : i64, tpu.core_type = #tpu.core_type<tc>} {
    %c0 = arith.constant 0 : index
    %c0_0 = arith.constant 0 : index
    %0 = vector.load %arg0[%c0, %c0_0] : memref<8x16xf32, #tpu.memory_space<vmem>>, vector<8x16xf32>
    %c0_1 = arith.constant 0 : index
    %c0_2 = arith.constant 0 : index
    %1 = vector.load %arg1[%c0_1, %c0_2] : memref<16x128xf32, #tpu.memory_space<vmem>>, vector<16x128xf32>
    %cst = arith.constant dense<0.000000e+00> : vector<8x128xf32>
    %2 = tpu.matmul %0, %1, %cst {dimension_numbers = #tpu.dot_dimension_numbers<[1], [0], [0], [1], [0, 0, 1, 1], [], []>} : vector<8x16xf32>, vector<16x128xf32>, vector<8x128xf32> -> vector<8x128xf32>
    %c0_3 = arith.constant 0 : index
    %c0_4 = arith.constant 0 : index
    %3 = vector.load %arg2[%c0_3, %c0_4] : memref<1x128xf32, #tpu.memory_space<vmem>>, vector<1x128xf32>
    %4 = vector.broadcast %3 : vector<1x128xf32> to vector<8x128xf32>
    %5 = arith.addf %2, %4 : vector<8x128xf32>
    %6 = math.tanh %5 : vector<8x128xf32>
    %c0_5 = arith.constant 0 : index
    %c0_6 = arith.constant 0 : index
    %7 = vector.load %arg3[%c0_5, %c0_6] : memref<128x128xf32, #tpu.memory_space<vmem>>, vector<128x128xf32>
    %c0_7 = arith.constant 0 : index
    %c0_8 = arith.constant 0 : index
    %8 = vector.load %arg4[%c0_7, %c0_8] : memref<1x128xf32, #tpu.memory_space<vmem>>, vector<1x128xf32>
    %9 = vector.shape_cast %8 : vector<1x128xf32> to vector<1x128xf32>
    %10 = vector.broadcast %9 : vector<1x128xf32> to vector<8x128xf32>
    %c0_9 = arith.constant 0 : index
    %c0_10 = arith.constant 0 : index
    %11 = vector.load %arg5[%c0_9, %c0_10] : memref<128x128xf32, #tpu.memory_space<vmem>>, vector<128x128xf32>
    %cst_11 = arith.constant 1.000000e-01 : f32
    %12 = vector.broadcast %cst_11 : f32 to vector<128x128xf32>
    %13 = arith.mulf %12, %11 : vector<128x128xf32>
    %c0_12 = arith.constant 0 : index
    %c0_13 = arith.constant 0 : index
    %14 = vector.load %arg6[%c0_12, %c0_13] : memref<1x128xf32, #tpu.memory_space<vmem>>, vector<1x128xf32>
    %cst_14 = arith.constant 1.000000e-01 : f32
    %15 = vector.broadcast %cst_14 : f32 to vector<1x128xf32>
    %16 = arith.mulf %15, %14 : vector<1x128xf32>
    %17 = vector.shape_cast %16 : vector<1x128xf32> to vector<1x128xf32>
    %18 = vector.broadcast %17 : vector<1x128xf32> to vector<8x128xf32>
    %cst_15 = arith.constant dense<0.000000e+00> : vector<8x128xf32>
    %19 = tpu.matmul %6, %7, %cst_15 {dimension_numbers = #tpu.dot_dimension_numbers<[1], [0], [0], [1], [0, 0, 1, 1], [], []>} : vector<8x128xf32>, vector<128x128xf32>, vector<8x128xf32> -> vector<8x128xf32>
    %20 = arith.addf %19, %10 : vector<8x128xf32>
    %21 = math.tanh %20 : vector<8x128xf32>
    %cst_16 = arith.constant dense<0.000000e+00> : vector<8x128xf32>
    %22 = tpu.matmul %21, %13, %cst_16 {dimension_numbers = #tpu.dot_dimension_numbers<[1], [0], [0], [1], [0, 0, 1, 1], [], []>} : vector<8x128xf32>, vector<128x128xf32>, vector<8x128xf32> -> vector<8x128xf32>
    %23 = arith.addf %22, %18 : vector<8x128xf32>
    %24 = arith.addf %6, %23 : vector<8x128xf32>
    %c0_17 = arith.constant 0 : index
    %c0_18 = arith.constant 0 : index
    %c0_19 = arith.constant 0 : index
    %25 = vector.load %arg9[%c0_17, %c0_18, %c0_19] : memref<8x8x128xf32, #tpu.memory_space<vmem>>, vector<1x8x128xf32>
    %26 = vector.shape_cast %25 : vector<1x8x128xf32> to vector<8x128xf32>
    %27 = vector.shape_cast %24 : vector<8x128xf32> to vector<1x8x128xf32>
    tpu.vector_store %arg9[%c0_17, %c0_18, %c0_19], %27 {strides = array<i32>} : memref<8x8x128xf32, #tpu.memory_space<vmem>>, vector<1x8x128xf32>,
    %cst_20 = arith.constant dense<0.000000e+00> : vector<8x128xf32>
    %28 = tpu.matmul %24, %7, %cst_20 {dimension_numbers = #tpu.dot_dimension_numbers<[1], [0], [0], [1], [0, 0, 1, 1], [], []>} : vector<8x128xf32>, vector<128x128xf32>, vector<8x128xf32> -> vector<8x128xf32>
    %29 = arith.addf %28, %10 : vector<8x128xf32>
    %30 = math.tanh %29 : vector<8x128xf32>
    %cst_21 = arith.constant dense<0.000000e+00> : vector<8x128xf32>
    %31 = tpu.matmul %30, %13, %cst_21 {dimension_numbers = #tpu.dot_dimension_numbers<[1], [0], [0], [1], [0, 0, 1, 1], [], []>} : vector<8x128xf32>, vector<128x128xf32>, vector<8x128xf32> -> vector<8x128xf32>
    %32 = arith.addf %31, %18 : vector<8x128xf32>
    %33 = arith.addf %24, %32 : vector<8x128xf32>
    %c1 = arith.constant 1 : index
    %c0_22 = arith.constant 0 : index
    %c0_23 = arith.constant 0 : index
    %34 = vector.load %arg9[%c1, %c0_22, %c0_23] : memref<8x8x128xf32, #tpu.memory_space<vmem>>, vector<1x8x128xf32>
    %35 = vector.shape_cast %34 : vector<1x8x128xf32> to vector<8x128xf32>
    %36 = vector.shape_cast %33 : vector<8x128xf32> to vector<1x8x128xf32>
    tpu.vector_store %arg9[%c1, %c0_22, %c0_23], %36 {strides = array<i32>} : memref<8x8x128xf32, #tpu.memory_space<vmem>>, vector<1x8x128xf32>,
    %cst_24 = arith.constant dense<0.000000e+00> : vector<8x128xf32>
    %37 = tpu.matmul %33, %7, %cst_24 {dimension_numbers = #tpu.dot_dimension_numbers<[1], [0], [0], [1], [0, 0, 1, 1], [], []>} : vector<8x128xf32>, vector<128x128xf32>, vector<8x128xf32> -> vector<8x128xf32>
    %38 = arith.addf %37, %10 : vector<8x128xf32>
    %39 = math.tanh %38 : vector<8x128xf32>
    %cst_25 = arith.constant dense<0.000000e+00> : vector<8x128xf32>
    %40 = tpu.matmul %39, %13, %cst_25 {dimension_numbers = #tpu.dot_dimension_numbers<[1], [0], [0], [1], [0, 0, 1, 1], [], []>} : vector<8x128xf32>, vector<128x128xf32>, vector<8x128xf32> -> vector<8x128xf32>
    %41 = arith.addf %40, %18 : vector<8x128xf32>
    %42 = arith.addf %33, %41 : vector<8x128xf32>
    %c2 = arith.constant 2 : index
    %c0_26 = arith.constant 0 : index
    %c0_27 = arith.constant 0 : index
    %43 = vector.load %arg9[%c2, %c0_26, %c0_27] : memref<8x8x128xf32, #tpu.memory_space<vmem>>, vector<1x8x128xf32>
    %44 = vector.shape_cast %43 : vector<1x8x128xf32> to vector<8x128xf32>
    %45 = vector.shape_cast %42 : vector<8x128xf32> to vector<1x8x128xf32>
    tpu.vector_store %arg9[%c2, %c0_26, %c0_27], %45 {strides = array<i32>} : memref<8x8x128xf32, #tpu.memory_space<vmem>>, vector<1x8x128xf32>,
    %cst_28 = arith.constant dense<0.000000e+00> : vector<8x128xf32>
    %46 = tpu.matmul %42, %7, %cst_28 {dimension_numbers = #tpu.dot_dimension_numbers<[1], [0], [0], [1], [0, 0, 1, 1], [], []>} : vector<8x128xf32>, vector<128x128xf32>, vector<8x128xf32> -> vector<8x128xf32>
    %47 = arith.addf %46, %10 : vector<8x128xf32>
    %48 = math.tanh %47 : vector<8x128xf32>
    %cst_29 = arith.constant dense<0.000000e+00> : vector<8x128xf32>
    %49 = tpu.matmul %48, %13, %cst_29 {dimension_numbers = #tpu.dot_dimension_numbers<[1], [0], [0], [1], [0, 0, 1, 1], [], []>} : vector<8x128xf32>, vector<128x128xf32>, vector<8x128xf32> -> vector<8x128xf32>
    %50 = arith.addf %49, %18 : vector<8x128xf32>
    %51 = arith.addf %42, %50 : vector<8x128xf32>
    %c3 = arith.constant 3 : index
    %c0_30 = arith.constant 0 : index
    %c0_31 = arith.constant 0 : index
    %52 = vector.load %arg9[%c3, %c0_30, %c0_31] : memref<8x8x128xf32, #tpu.memory_space<vmem>>, vector<1x8x128xf32>
    %53 = vector.shape_cast %52 : vector<1x8x128xf32> to vector<8x128xf32>
    %54 = vector.shape_cast %51 : vector<8x128xf32> to vector<1x8x128xf32>
    tpu.vector_store %arg9[%c3, %c0_30, %c0_31], %54 {strides = array<i32>} : memref<8x8x128xf32, #tpu.memory_space<vmem>>, vector<1x8x128xf32>,
    %cst_32 = arith.constant dense<0.000000e+00> : vector<8x128xf32>
    %55 = tpu.matmul %51, %7, %cst_32 {dimension_numbers = #tpu.dot_dimension_numbers<[1], [0], [0], [1], [0, 0, 1, 1], [], []>} : vector<8x128xf32>, vector<128x128xf32>, vector<8x128xf32> -> vector<8x128xf32>
    %56 = arith.addf %55, %10 : vector<8x128xf32>
    %57 = math.tanh %56 : vector<8x128xf32>
    %cst_33 = arith.constant dense<0.000000e+00> : vector<8x128xf32>
    %58 = tpu.matmul %57, %13, %cst_33 {dimension_numbers = #tpu.dot_dimension_numbers<[1], [0], [0], [1], [0, 0, 1, 1], [], []>} : vector<8x128xf32>, vector<128x128xf32>, vector<8x128xf32> -> vector<8x128xf32>
    %59 = arith.addf %58, %18 : vector<8x128xf32>
    %60 = arith.addf %51, %59 : vector<8x128xf32>
    %c4 = arith.constant 4 : index
    %c0_34 = arith.constant 0 : index
    %c0_35 = arith.constant 0 : index
    %61 = vector.load %arg9[%c4, %c0_34, %c0_35] : memref<8x8x128xf32, #tpu.memory_space<vmem>>, vector<1x8x128xf32>
    %62 = vector.shape_cast %61 : vector<1x8x128xf32> to vector<8x128xf32>
    %63 = vector.shape_cast %60 : vector<8x128xf32> to vector<1x8x128xf32>
    tpu.vector_store %arg9[%c4, %c0_34, %c0_35], %63 {strides = array<i32>} : memref<8x8x128xf32, #tpu.memory_space<vmem>>, vector<1x8x128xf32>,
    %cst_36 = arith.constant dense<0.000000e+00> : vector<8x128xf32>
    %64 = tpu.matmul %60, %7, %cst_36 {dimension_numbers = #tpu.dot_dimension_numbers<[1], [0], [0], [1], [0, 0, 1, 1], [], []>} : vector<8x128xf32>, vector<128x128xf32>, vector<8x128xf32> -> vector<8x128xf32>
    %65 = arith.addf %64, %10 : vector<8x128xf32>
    %66 = math.tanh %65 : vector<8x128xf32>
    %cst_37 = arith.constant dense<0.000000e+00> : vector<8x128xf32>
    %67 = tpu.matmul %66, %13, %cst_37 {dimension_numbers = #tpu.dot_dimension_numbers<[1], [0], [0], [1], [0, 0, 1, 1], [], []>} : vector<8x128xf32>, vector<128x128xf32>, vector<8x128xf32> -> vector<8x128xf32>
    %68 = arith.addf %67, %18 : vector<8x128xf32>
    %69 = arith.addf %60, %68 : vector<8x128xf32>
    %c5 = arith.constant 5 : index
    %c0_38 = arith.constant 0 : index
    %c0_39 = arith.constant 0 : index
    %70 = vector.load %arg9[%c5, %c0_38, %c0_39] : memref<8x8x128xf32, #tpu.memory_space<vmem>>, vector<1x8x128xf32>
    %71 = vector.shape_cast %70 : vector<1x8x128xf32> to vector<8x128xf32>
    %72 = vector.shape_cast %69 : vector<8x128xf32> to vector<1x8x128xf32>
    tpu.vector_store %arg9[%c5, %c0_38, %c0_39], %72 {strides = array<i32>} : memref<8x8x128xf32, #tpu.memory_space<vmem>>, vector<1x8x128xf32>,
    %cst_40 = arith.constant dense<0.000000e+00> : vector<8x128xf32>
    %73 = tpu.matmul %69, %7, %cst_40 {dimension_numbers = #tpu.dot_dimension_numbers<[1], [0], [0], [1], [0, 0, 1, 1], [], []>} : vector<8x128xf32>, vector<128x128xf32>, vector<8x128xf32> -> vector<8x128xf32>
    %74 = arith.addf %73, %10 : vector<8x128xf32>
    %75 = math.tanh %74 : vector<8x128xf32>
    %cst_41 = arith.constant dense<0.000000e+00> : vector<8x128xf32>
    %76 = tpu.matmul %75, %13, %cst_41 {dimension_numbers = #tpu.dot_dimension_numbers<[1], [0], [0], [1], [0, 0, 1, 1], [], []>} : vector<8x128xf32>, vector<128x128xf32>, vector<8x128xf32> -> vector<8x128xf32>
    %77 = arith.addf %76, %18 : vector<8x128xf32>
    %78 = arith.addf %69, %77 : vector<8x128xf32>
    %c6 = arith.constant 6 : index
    %c0_42 = arith.constant 0 : index
    %c0_43 = arith.constant 0 : index
    %79 = vector.load %arg9[%c6, %c0_42, %c0_43] : memref<8x8x128xf32, #tpu.memory_space<vmem>>, vector<1x8x128xf32>
    %80 = vector.shape_cast %79 : vector<1x8x128xf32> to vector<8x128xf32>
    %81 = vector.shape_cast %78 : vector<8x128xf32> to vector<1x8x128xf32>
    tpu.vector_store %arg9[%c6, %c0_42, %c0_43], %81 {strides = array<i32>} : memref<8x8x128xf32, #tpu.memory_space<vmem>>, vector<1x8x128xf32>,
    %cst_44 = arith.constant dense<0.000000e+00> : vector<8x128xf32>
    %82 = tpu.matmul %78, %7, %cst_44 {dimension_numbers = #tpu.dot_dimension_numbers<[1], [0], [0], [1], [0, 0, 1, 1], [], []>} : vector<8x128xf32>, vector<128x128xf32>, vector<8x128xf32> -> vector<8x128xf32>
    %83 = arith.addf %82, %10 : vector<8x128xf32>
    %84 = math.tanh %83 : vector<8x128xf32>
    %cst_45 = arith.constant dense<0.000000e+00> : vector<8x128xf32>
    %85 = tpu.matmul %84, %13, %cst_45 {dimension_numbers = #tpu.dot_dimension_numbers<[1], [0], [0], [1], [0, 0, 1, 1], [], []>} : vector<8x128xf32>, vector<128x128xf32>, vector<8x128xf32> -> vector<8x128xf32>
    %86 = arith.addf %85, %18 : vector<8x128xf32>
    %87 = arith.addf %78, %86 : vector<8x128xf32>
    %c7 = arith.constant 7 : index
    %c0_46 = arith.constant 0 : index
    %c0_47 = arith.constant 0 : index
    %88 = vector.load %arg9[%c7, %c0_46, %c0_47] : memref<8x8x128xf32, #tpu.memory_space<vmem>>, vector<1x8x128xf32>
    %89 = vector.shape_cast %88 : vector<1x8x128xf32> to vector<8x128xf32>
    %90 = vector.shape_cast %87 : vector<8x128xf32> to vector<1x8x128xf32>
    tpu.vector_store %arg9[%c7, %c0_46, %c0_47], %90 {strides = array<i32>} : memref<8x8x128xf32, #tpu.memory_space<vmem>>, vector<1x8x128xf32>,
    %c0_48 = arith.constant 0 : index
    %c0_49 = arith.constant 0 : index
    %91 = vector.load %arg10[%c0_48, %c0_49] : memref<8x128xf32, #tpu.memory_space<vmem>>, vector<8x128xf32>
    tpu.vector_store %arg10[%c0_48, %c0_49], %87 {strides = array<i32>} : memref<8x128xf32, #tpu.memory_space<vmem>>, vector<8x128xf32>,
    %c0_50 = arith.constant 0 : index
    %c0_51 = arith.constant 0 : index
    %92 = vector.load %arg7[%c0_50, %c0_51] : memref<128x10xf32, #tpu.memory_space<vmem>>, vector<128x10xf32>
    %cst_52 = arith.constant dense<0.000000e+00> : vector<8x10xf32>
    %93 = tpu.matmul %87, %92, %cst_52 {dimension_numbers = #tpu.dot_dimension_numbers<[1], [0], [0], [1], [0, 0, 1, 1], [], []>} : vector<8x128xf32>, vector<128x10xf32>, vector<8x10xf32> -> vector<8x10xf32>
    %c0_53 = arith.constant 0 : index
    %c0_54 = arith.constant 0 : index
    %94 = vector.load %arg8[%c0_53, %c0_54] : memref<1x10xf32, #tpu.memory_space<vmem>>, vector<1x10xf32>
    %95 = vector.broadcast %94 : vector<1x10xf32> to vector<8x10xf32>
    %96 = arith.addf %93, %95 : vector<8x10xf32>
    %c0_55 = arith.constant 0 : index
    %c0_56 = arith.constant 0 : index
    %97 = vector.load %arg11[%c0_55, %c0_56] : memref<8x10xf32, #tpu.memory_space<vmem>>, vector<8x10xf32>
    tpu.vector_store %arg11[%c0_55, %c0_56], %96 {strides = array<i32>} : memref<8x10xf32, #tpu.memory_space<vmem>>, vector<8x10xf32>,
    return
  }
}

</mosaic_0001>

<llo_original>
// kernel: neural_ode_forward.1
$region0: #{neural_ode_forward.1}
  #allocation0 [shape = 'u32[]', space=smem, size = 0x4, offset = 0x4, fixed_abs, tag = 'smem constant byte address 0x4 - core index']
  #allocation1 [shape = 'u32[144,128]{1,0:T(1,128)}', space=vmem, size = 0x12000, scoped, tag = 'internal scratch']
  %s0 = inlined_call_operand.vmem [shape: f32[8,16], index: 0, kind: input, shape index: {}]
  %s1 = inlined_call_operand.vmem [shape: f32[16,128], index: 1, kind: input, shape index: {}]
  %s2 = inlined_call_operand.vmem [shape: f32[1,128], index: 2, kind: input, shape index: {}]
  %s3 = inlined_call_operand.vmem [shape: f32[128,128], index: 3, kind: input, shape index: {}]
  %s4 = inlined_call_operand.vmem [shape: f32[1,128], index: 4, kind: input, shape index: {}]
  %s5 = inlined_call_operand.vmem [shape: f32[128,128], index: 5, kind: input, shape index: {}]
  %s6 = inlined_call_operand.vmem [shape: f32[1,128], index: 6, kind: input, shape index: {}]
  %s7 = inlined_call_operand.vmem [shape: f32[128,10], index: 7, kind: input, shape index: {}]
  %s8 = inlined_call_operand.vmem [shape: f32[1,10], index: 8, kind: input, shape index: {}]
  %s9 = inlined_call_operand.vmem [shape: f32[8,8,128], index: 9, kind: output, shape index: {0}]
  %s10 = inlined_call_operand.hbm [shape: f32[8,128], index: 10, kind: output, shape index: {1}]
  %s11 = inlined_call_operand.hbm [shape: f32[8,10], index: 11, kind: output, shape index: {2}]
  %12 = xla_tuple %s9, %s10, %s11
  %s13 = sld [smem:[#allocation0]]
  $region62: #{neural_ode_forward.1} parent=0
    _
  %s15 = ssub.s32 1, %s13
  %s16 = scalar_select 0, %s15, %s13
  $region1: #{neural_ode_forward.1} parent=0
    #allocation2 [shape = 'u8[4096]{0}', space=vmem, size = 0x1000, scoped, tag = 'output window, operand 1, single buffered']
    #allocation3 [shape = 's32[1]{0}', space=sflag, size = 0x4, scoped, tag = 'scoped memory for neural_ode_forward.1']
    #allocation4 [shape = 'u8[4096]{0}', space=vmem, size = 0x1000, scoped, tag = 'output window, operand 2, single buffered']
    #allocation5 [shape = 's32[1]{0}', space=sflag, size = 0x4, scoped, tag = 'scoped memory for neural_ode_forward.1']
    %17 = vsyncpa [#allocation3], 0
    %18 = vsyncpa [#allocation5], 0
    // Predicated region
    $region2: #{neural_ode_forward.1} parent=1 // pred_check
      _
    $region3: #{neural_ode_forward.1} parent=1 // pred_check_branch
      %20 = sbr.rel (0) target = $region5
    $region4: #{neural_ode_forward.1} parent=1 // pred_region
      _
    $region5: #{neural_ode_forward.1} parent=1 // pred_fallthru
      _
    // Predicated region
    $region6: #{neural_ode_forward.1} parent=1 // pred_check
      _
    $region7: #{neural_ode_forward.1} parent=1 // pred_check_branch
      %22 = sbr.rel (0) target = $region9
    $region8: #{neural_ode_forward.1} parent=1 // pred_region
      _
    $region9: #{neural_ode_forward.1} parent=1 // pred_fallthru
      _
    // Predicated region
    $region10: #{neural_ode_forward.1} parent=1 // pred_check
      _
    $region11: #{neural_ode_forward.1} parent=1 // pred_check_branch
      %24 = sbr.rel (0) target = $region13
    $region12: #{neural_ode_forward.1} parent=1 // pred_region
      _
    $region13: #{neural_ode_forward.1} parent=1 // pred_fallthru
      _
    // Predicated region
    $region14: #{neural_ode_forward.1} parent=1 // pred_check
      _
    $region15: #{neural_ode_forward.1} parent=1 // pred_check_branch
      %26 = sbr.rel (0) target = $region17
    $region16: #{neural_ode_forward.1} parent=1 // pred_region
      _
    $region17: #{neural_ode_forward.1} parent=1 // pred_fallthru
      _
    // Predicated region
    $region18: #{neural_ode_forward.1} parent=1 // pred_check
      _
    $region19: #{neural_ode_forward.1} parent=1 // pred_check_branch
      %28 = sbr.rel (0) target = $region21
    $region20: #{neural_ode_forward.1} parent=1 // pred_region
      _
    $region21: #{neural_ode_forward.1} parent=1 // pred_fallthru
      _
    // Predicated region
    $region22: #{neural_ode_forward.1} parent=1 // pred_check
      _
    $region23: #{neural_ode_forward.1} parent=1 // pred_check_branch
      %30 = sbr.rel (0) target = $region25
    $region24: #{neural_ode_forward.1} parent=1 // pred_region
      _
    $region25: #{neural_ode_forward.1} parent=1 // pred_fallthru
      _
    // Predicated region
    $region26: #{neural_ode_forward.1} parent=1 // pred_check
      _
    $region27: #{neural_ode_forward.1} parent=1 // pred_check_branch
      %32 = sbr.rel (0) target = $region29
    $region28: #{neural_ode_forward.1} parent=1 // pred_region
      _
    $region29: #{neural_ode_forward.1} parent=1 // pred_fallthru
      _
    // Predicated region
    $region30: #{neural_ode_forward.1} parent=1 // pred_check
      _
    $region31: #{neural_ode_forward.1} parent=1 // pred_check_branch
      %34 = sbr.rel (0) target = $region33
    $region32: #{neural_ode_forward.1} parent=1 // pred_region
      _
    $region33: #{neural_ode_forward.1} parent=1 // pred_fallthru
      _
    // Predicated region
    $region34: #{neural_ode_forward.1} parent=1 // pred_check
      _
    $region35: #{neural_ode_forward.1} parent=1 // pred_check_branch
      %36 = sbr.rel (0) target = $region37
    $region36: #{neural_ode_forward.1} parent=1 // pred_region
      _
    $region37: #{neural_ode_forward.1} parent=1 // pred_fallthru
      _
    %v37 = vld [vmem:[%s0] sm:$0xff]
    %v38 = vld [vmem:[%s1] sm:$0xff]
    %v39 = vld [vmem:[%s1 + $0x8] sm:$0xff]
    %v40 = vld [vmem:[%s2] sm:$0x1]
    %v42 = vlaneseq
    %v43 = vshrl.u32 %v42, 7
    %v44 = vsub.s32 0, %v43
    %v45 = vrot.slane %v40, %v44
    %vm47 = vcmask 130048
    %v49 = vsel %vm47, %v37, 0
    %51 = vmatprep.subr.mxu0 0.0
    %52 = vmatpush1.msra.mxu0 %v38
    %53 = vmatprep.subr.mxu0 0.0
    %54 = vmatpush1.msra.mxu0 %v39
    %55 = vmatprep.subr.mxu0 0.0
    %56 = vmatpush1.msra.mxu0 0.0
    %57 = vmatprep.subr.mxu0 0.0
    %58 = vmatpush1.msra.mxu0 0.0
    %59 = vmatprep.subr.mxu0 0.0
    %60 = vmatpush1.msra.mxu0 0.0
    %61 = vmatprep.subr.mxu0 0.0
    %62 = vmatpush1.msra.mxu0 0.0
    %63 = vmatprep.subr.mxu0 0.0
    %64 = vmatpush1.msra.mxu0 0.0
    %65 = vmatprep.subr.mxu0 0.0
    %66 = vmatpush1.msra.mxu0 0.0
    %67 = vmatprep.subr.mxu0 0.0
    %68 = vmatpush1.msra.mxu0 0.0
    %69 = vmatprep.subr.mxu0 0.0
    %70 = vmatpush1.msra.mxu0 0.0
    %71 = vmatprep.subr.mxu0 0.0
    %72 = vmatpush1.msra.mxu0 0.0
    %73 = vmatprep.subr.mxu0 0.0
    %74 = vmatpush1.msra.mxu0 0.0
    %75 = vmatprep.subr.mxu0 0.0
    %76 = vmatpush1.msra.mxu0 0.0
    %77 = vmatprep.subr.mxu0 0.0
    %78 = vmatpush1.msra.mxu0 0.0
    %79 = vmatprep.subr.mxu0 0.0
    %80 = vmatpush1.msra.mxu0 0.0
    %81 = vmatprep.subr.mxu0 0.0
    %82 = vmatpush1.msra.mxu0 0.0
    %83 = vmatprep.subr.mxu0 0.0
    %84 = vmatpush1.msra.mxu0 0.0
    %85 = vmatprep.subr.mxu0 0.0
    %86 = vmatpush1.msra.mxu0 0.0
    %87 = vmatprep.subr.mxu0 0.0
    %88 = vmatpush1.msra.mxu0 0.0
    %89 = vmatprep.subr.mxu0 0.0
    %90 = vmatpush1.msra.mxu0 0.0
    %91 = vmatprep.subr.mxu0 0.0
    %92 = vmatpush1.msra.mxu0 0.0
    %93 = vmatprep.subr.mxu0 0.0
    %94 = vmatpush1.msra.mxu0 0.0
    %95 = vmatprep.subr.mxu0 0.0
    %96 = vmatpush1.msra.mxu0 0.0
    %97 = vmatprep.subr.mxu0 0.0
    %98 = vmatpush1.msra.mxu0 0.0
    %99 = vmatprep.subr.mxu0 0.0
    %100 = vmatpush1.msra.mxu0 0.0
    %101 = vmatprep.subr.mxu0 0.0
    %102 = vmatpush1.msra.mxu0 0.0
    %103 = vmatprep.subr.mxu0 0.0
    %104 = vmatpush1.msra.mxu0 0.0
    %105 = vmatprep.subr.mxu0 0.0
    %106 = vmatpush1.msra.mxu0 0.0
    %107 = vmatprep.subr.mxu0 0.0
    %108 = vmatpush1.msra.mxu0 0.0
    %109 = vmatprep.subr.mxu0 0.0
    %110 = vmatpush1.msra.mxu0 0.0
    %111 = vmatprep.subr.mxu0 0.0
    %112 = vmatpush1.msra.mxu0 0.0
    %113 = vmatprep.subr.mxu0 0.0
    %114 = vmatpush1.msra.mxu0 0.0
    %115 = vmatprep.mubr.f32.mxu0 0.0
    %116 = vmatmul.mubr.f32.gmra.mrb[0].mxu0 %v49
    %v117 = vpop.f32.mrb[0].mxu0
    %v118 = vadd.f32 %v45, %v117
    %v119 = vpop.f32.mrb[0].mxu0
    %120 = vdwg.mxu0
    %v121 = vtanh.pop %v118
    %v122 = vld [vmem:[%s3] sm:$0xff]
    %v123 = vld [vmem:[%s3 + $0x8] sm:$0xff]
    %v124 = vld [vmem:[%s3 + $0x10] sm:$0xff]
    %v125 = vld [vmem:[%s3 + $0x18] sm:$0xff]
    %v126 = vld [vmem:[%s3 + $0x20] sm:$0xff]
    %v127 = vld [vmem:[%s3 + $0x28] sm:$0xff]
    %v128 = vld [vmem:[%s3 + $0x30] sm:$0xff]
    %v129 = vld [vmem:[%s3 + $0x38] sm:$0xff]
    %v130 = vld [vmem:[%s3 + $0x40] sm:$0xff]
    %v131 = vld [vmem:[%s3 + $0x48] sm:$0xff]
    %v132 = vld [vmem:[%s3 + $0x50] sm:$0xff]
    %v133 = vld [vmem:[%s3 + $0x58] sm:$0xff]
    %v134 = vld [vmem:[%s3 + $0x60] sm:$0xff]
    %v135 = vld [vmem:[%s3 + $0x68] sm:$0xff]
    %v136 = vld [vmem:[%s3 + $0x70] sm:$0xff]
    %v137 = vld [vmem:[%s3 + $0x78] sm:$0xff]
    %v138 = vld [vmem:[%s4] sm:$0x1]
    %v140 = vlaneseq
    %v141 = vshrl.u32 %v140, 7
    %v142 = vsub.s32 0, %v141
    %v143 = vrot.slane %v138, %v142
    %v145 = vld [vmem:[%s5] sm:$0xff]
    %v146 = vld [vmem:[%s5 + $0x8] sm:$0xff]
    %v147 = vld [vmem:[%s5 + $0x10] sm:$0xff]
    %v148 = vld [vmem:[%s5 + $0x18] sm:$0xff]
    %v149 = vld [vmem:[%s5 + $0x20] sm:$0xff]
    %v150 = vld [vmem:[%s5 + $0x28] sm:$0xff]
    %v151 = vld [vmem:[%s5 + $0x30] sm:$0xff]
    %v152 = vld [vmem:[%s5 + $0x38] sm:$0xff]
    %v153 = vld [vmem:[%s5 + $0x40] sm:$0xff]
    %v154 = vld [vmem:[%s5 + $0x48] sm:$0xff]
    %v155 = vld [vmem:[%s5 + $0x50] sm:$0xff]
    %v156 = vld [vmem:[%s5 + $0x58] sm:$0xff]
    %v157 = vld [vmem:[%s5 + $0x60] sm:$0xff]
    %v158 = vld [vmem:[%s5 + $0x68] sm:$0xff]
    %v159 = vld [vmem:[%s5 + $0x70] sm:$0xff]
    %v160 = vld [vmem:[%s5 + $0x78] sm:$0xff]
    %v161 = vmul.f32 %v145, 0.1
    %v162 = vmul.f32 %v146, 0.1
    %v163 = vmul.f32 %v147, 0.1
    %v164 = vmul.f32 %v148, 0.1
    %v165 = vmul.f32 %v149, 0.1
    %v166 = vmul.f32 %v150, 0.1
    %v167 = vmul.f32 %v151, 0.1
    %v168 = vmul.f32 %v152, 0.1
    %v169 = vmul.f32 %v153, 0.1
    %v170 = vmul.f32 %v154, 0.1
    %v171 = vmul.f32 %v155, 0.1
    %v172 = vmul.f32 %v156, 0.1
    %v173 = vmul.f32 %v157, 0.1
    %v174 = vmul.f32 %v158, 0.1
    %v175 = vmul.f32 %v159, 0.1
    %v176 = vmul.f32 %v160, 0.1
    %v177 = vld [vmem:[%s6] sm:$0x1]
    %v178 = vmul.f32 %v177, 0.1
    %v180 = vlaneseq
    %v181 = vshrl.u32 %v180, 7
    %v182 = vsub.s32 0, %v181
    %v183 = vrot.slane %v178, %v182
    %185 = vmatprep.subr.mxu0 0.0
    %186 = vmatpush1.msra.mxu0 %v122
    %187 = vmatprep.subr.mxu0 0.0
    %188 = vmatpush1.msra.mxu0 %v123
    %189 = vmatprep.subr.mxu0 0.0
    %190 = vmatpush1.msra.mxu0 %v124
    %191 = vmatprep.subr.mxu0 0.0
    %192 = vmatpush1.msra.mxu0 %v125
    %193 = vmatprep.subr.mxu0 0.0
    %194 = vmatpush1.msra.mxu0 %v126
    %195 = vmatprep.subr.mxu0 0.0
    %196 = vmatpush1.msra.mxu0 %v127
    %197 = vmatprep.subr.mxu0 0.0
    %198 = vmatpush1.msra.mxu0 %v128
    %199 = vmatprep.subr.mxu0 0.0
    %200 = vmatpush1.msra.mxu0 %v129
    %201 = vmatprep.subr.mxu0 0.0
    %202 = vmatpush1.msra.mxu0 %v130
    %203 = vmatprep.subr.mxu0 0.0
    %204 = vmatpush1.msra.mxu0 %v131
    %205 = vmatprep.subr.mxu0 0.0
    %206 = vmatpush1.msra.mxu0 %v132
    %207 = vmatprep.subr.mxu0 0.0
    %208 = vmatpush1.msra.mxu0 %v133
    %209 = vmatprep.subr.mxu0 0.0
    %210 = vmatpush1.msra.mxu0 %v134
    %211 = vmatprep.subr.mxu0 0.0
    %212 = vmatpush1.msra.mxu0 %v135
    %213 = vmatprep.subr.mxu0 0.0
    %214 = vmatpush1.msra.mxu0 %v136
    %215 = vmatprep.subr.mxu0 0.0
    %216 = vmatpush1.msra.mxu0 %v137
    %217 = vmatprep.subr.mxu0 0.0
    %218 = vmatpush1.msra.mxu0 0.0
    %219 = vmatprep.subr.mxu0 0.0
    %220 = vmatpush1.msra.mxu0 0.0
    %221 = vmatprep.subr.mxu0 0.0
    %222 = vmatpush1.msra.mxu0 0.0
    %223 = vmatprep.subr.mxu0 0.0
    %224 = vmatpush1.msra.mxu0 0.0
    %225 = vmatprep.subr.mxu0 0.0
    %226 = vmatpush1.msra.mxu0 0.0
    %227 = vmatprep.subr.mxu0 0.0
    %228 = vmatpush1.msra.mxu0 0.0
    %229 = vmatprep.subr.mxu0 0.0
    %230 = vmatpush1.msra.mxu0 0.0
    %231 = vmatprep.subr.mxu0 0.0
    %232 = vmatpush1.msra.mxu0 0.0
    %233 = vmatprep.subr.mxu0 0.0
    %234 = vmatpush1.msra.mxu0 0.0
    %235 = vmatprep.subr.mxu0 0.0
    %236 = vmatpush1.msra.mxu0 0.0
    %237 = vmatprep.subr.mxu0 0.0
    %238 = vmatpush1.msra.mxu0 0.0
    %239 = vmatprep.subr.mxu0 0.0
    %240 = vmatpush1.msra.mxu0 0.0
    %241 = vmatprep.subr.mxu0 0.0
    %242 = vmatpush1.msra.mxu0 0.0
    %243 = vmatprep.subr.mxu0 0.0
    %244 = vmatpush1.msra.mxu0 0.0
    %245 = vmatprep.subr.mxu0 0.0
    %246 = vmatpush1.msra.mxu0 0.0
    %247 = vmatprep.subr.mxu0 0.0
    %248 = vmatpush1.msra.mxu0 0.0
    %249 = vmatprep.mubr.f32.mxu0 0.0
    %250 = vmatmul.mubr.f32.gmra.mrb[0].mxu0 %v121
    %v251 = vpop.f32.mrb[0].mxu0
    %v252 = vadd.f32 %v143, %v251
    %v253 = vpop.f32.mrb[0].mxu0
    %254 = vdwg.mxu0
    %v255 = vtanh.pop %v252
    %256 = vmatprep.subr.mxu0 0.0
    %257 = vmatpush1.msra.mxu0 %v161
    %258 = vmatprep.subr.mxu0 0.0
    %259 = vmatpush1.msra.mxu0 %v162
    %260 = vmatprep.subr.mxu0 0.0
    %261 = vmatpush1.msra.mxu0 %v163
    %262 = vmatprep.subr.mxu0 0.0
    %263 = vmatpush1.msra.mxu0 %v164
    %264 = vmatprep.subr.mxu0 0.0
    %265 = vmatpush1.msra.mxu0 %v165
    %266 = vmatprep.subr.mxu0 0.0
    %267 = vmatpush1.msra.mxu0 %v166
    %268 = vmatprep.subr.mxu0 0.0
    %269 = vmatpush1.msra.mxu0 %v167
    %270 = vmatprep.subr.mxu0 0.0
    %271 = vmatpush1.msra.mxu0 %v168
    %272 = vmatprep.subr.mxu0 0.0
    %273 = vmatpush1.msra.mxu0 %v169
    %274 = vmatprep.subr.mxu0 0.0
    %275 = vmatpush1.msra.mxu0 %v170
    %276 = vmatprep.subr.mxu0 0.0
    %277 = vmatpush1.msra.mxu0 %v171
    %278 = vmatprep.subr.mxu0 0.0
    %279 = vmatpush1.msra.mxu0 %v172
    %280 = vmatprep.subr.mxu0 0.0
    %281 = vmatpush1.msra.mxu0 %v173
    %282 = vmatprep.subr.mxu0 0.0
    %283 = vmatpush1.msra.mxu0 %v174
    %284 = vmatprep.subr.mxu0 0.0
    %285 = vmatpush1.msra.mxu0 %v175
    %286 = vmatprep.subr.mxu0 0.0
    %287 = vmatpush1.msra.mxu0 %v176
    %288 = vmatprep.subr.mxu0 0.0
    %289 = vmatpush1.msra.mxu0 0.0
    %290 = vmatprep.subr.mxu0 0.0
    %291 = vmatpush1.msra.mxu0 0.0
    %292 = vmatprep.subr.mxu0 0.0
    %293 = vmatpush1.msra.mxu0 0.0
    %294 = vmatprep.subr.mxu0 0.0
    %295 = vmatpush1.msra.mxu0 0.0
    %296 = vmatprep.subr.mxu0 0.0
    %297 = vmatpush1.msra.mxu0 0.0
    %298 = vmatprep.subr.mxu0 0.0
    %299 = vmatpush1.msra.mxu0 0.0
    %300 = vmatprep.subr.mxu0 0.0
    %301 = vmatpush1.msra.mxu0 0.0
    %302 = vmatprep.subr.mxu0 0.0
    %303 = vmatpush1.msra.mxu0 0.0
    %304 = vmatprep.subr.mxu0 0.0
    %305 = vmatpush1.msra.mxu0 0.0
    %306 = vmatprep.subr.mxu0 0.0
    %307 = vmatpush1.msra.mxu0 0.0
    %308 = vmatprep.subr.mxu0 0.0
    %309 = vmatpush1.msra.mxu0 0.0
    %310 = vmatprep.subr.mxu0 0.0
    %311 = vmatpush1.msra.mxu0 0.0
    %312 = vmatprep.subr.mxu0 0.0
    %313 = vmatpush1.msra.mxu0 0.0
    %314 = vmatprep.subr.mxu0 0.0
    %315 = vmatpush1.msra.mxu0 0.0
    %316 = vmatprep.subr.mxu0 0.0
    %317 = vmatpush1.msra.mxu0 0.0
    %318 = vmatprep.subr.mxu0 0.0
    %319 = vmatpush1.msra.mxu0 0.0
    %320 = vmatprep.mubr.f32.mxu0 0.0
    %321 = vmatmul.mubr.f32.gmra.mrb[0].mxu0 %v255
    %v322 = vpop.f32.mrb[0].mxu0
    %v323 = vadd.f32 %v183, %v322
    %v324 = vpop.f32.mrb[0].mxu0
    %325 = vdwg.mxu0
    %v326 = vadd.f32 %v121, %v323
    %327 = vst [vmem:[%s9] sm:$0xff] %v326
    %328 = vmatprep.subr.mxu0 0.0
    %329 = vmatpush1.msra.mxu0 %v122
    %330 = vmatprep.subr.mxu0 0.0
    %331 = vmatpush1.msra.mxu0 %v123
    %332 = vmatprep.subr.mxu0 0.0
    %333 = vmatpush1.msra.mxu0 %v124
    %334 = vmatprep.subr.mxu0 0.0
    %335 = vmatpush1.msra.mxu0 %v125
    %336 = vmatprep.subr.mxu0 0.0
    %337 = vmatpush1.msra.mxu0 %v126
    %338 = vmatprep.subr.mxu0 0.0
    %339 = vmatpush1.msra.mxu0 %v127
    %340 = vmatprep.subr.mxu0 0.0
    %341 = vmatpush1.msra.mxu0 %v128
    %342 = vmatprep.subr.mxu0 0.0
    %343 = vmatpush1.msra.mxu0 %v129
    %344 = vmatprep.subr.mxu0 0.0
    %345 = vmatpush1.msra.mxu0 %v130
    %346 = vmatprep.subr.mxu0 0.0
    %347 = vmatpush1.msra.mxu0 %v131
    %348 = vmatprep.subr.mxu0 0.0
    %349 = vmatpush1.msra.mxu0 %v132
    %350 = vmatprep.subr.mxu0 0.0
    %351 = vmatpush1.msra.mxu0 %v133
    %352 = vmatprep.subr.mxu0 0.0
    %353 = vmatpush1.msra.mxu0 %v134
    %354 = vmatprep.subr.mxu0 0.0
    %355 = vmatpush1.msra.mxu0 %v135
    %356 = vmatprep.subr.mxu0 0.0
    %357 = vmatpush1.msra.mxu0 %v136
    %358 = vmatprep.subr.mxu0 0.0
    %359 = vmatpush1.msra.mxu0 %v137
    %360 = vmatprep.subr.mxu0 0.0
    %361 = vmatpush1.msra.mxu0 0.0
    %362 = vmatprep.subr.mxu0 0.0
    %363 = vmatpush1.msra.mxu0 0.0
    %364 = vmatprep.subr.mxu0 0.0
    %365 = vmatpush1.msra.mxu0 0.0
    %366 = vmatprep.subr.mxu0 0.0
    %367 = vmatpush1.msra.mxu0 0.0
    %368 = vmatprep.subr.mxu0 0.0
    %369 = vmatpush1.msra.mxu0 0.0
    %370 = vmatprep.subr.mxu0 0.0
    %371 = vmatpush1.msra.mxu0 0.0
    %372 = vmatprep.subr.mxu0 0.0
    %373 = vmatpush1.msra.mxu0 0.0
    %374 = vmatprep.subr.mxu0 0.0
    %375 = vmatpush1.msra.mxu0 0.0
    %376 = vmatprep.subr.mxu0 0.0
    %377 = vmatpush1.msra.mxu0 0.0
    %378 = vmatprep.subr.mxu0 0.0
    %379 = vmatpush1.msra.mxu0 0.0
    %380 = vmatprep.subr.mxu0 0.0
    %381 = vmatpush1.msra.mxu0 0.0
    %382 = vmatprep.subr.mxu0 0.0
    %383 = vmatpush1.msra.mxu0 0.0
    %384 = vmatprep.subr.mxu0 0.0
    %385 = vmatpush1.msra.mxu0 0.0
    %386 = vmatprep.subr.mxu0 0.0
    %387 = vmatpush1.msra.mxu0 0.0
    %388 = vmatprep.subr.mxu0 0.0
    %389 = vmatpush1.msra.mxu0 0.0
    %390 = vmatprep.subr.mxu0 0.0
    %391 = vmatpush1.msra.mxu0 0.0
    %392 = vmatprep.mubr.f32.mxu0 0.0
    %393 = vmatmul.mubr.f32.gmra.mrb[0].mxu0 %v326
    %v394 = vpop.f32.mrb[0].mxu0
    %v395 = vadd.f32 %v143, %v394
    %v396 = vpop.f32.mrb[0].mxu0
    %397 = vdwg.mxu0
    %v398 = vtanh.pop %v395
    %399 = vmatprep.subr.mxu0 0.0
    %400 = vmatpush1.msra.mxu0 %v161
    %401 = vmatprep.subr.mxu0 0.0
    %402 = vmatpush1.msra.mxu0 %v162
    %403 = vmatprep.subr.mxu0 0.0
    %404 = vmatpush1.msra.mxu0 %v163
    %405 = vmatprep.subr.mxu0 0.0
    %406 = vmatpush1.msra.mxu0 %v164
    %407 = vmatprep.subr.mxu0 0.0
    %408 = vmatpush1.msra.mxu0 %v165
    %409 = vmatprep.subr.mxu0 0.0
    %410 = vmatpush1.msra.mxu0 %v166
    %411 = vmatprep.subr.mxu0 0.0
    %412 = vmatpush1.msra.mxu0 %v167
    %413 = vmatprep.subr.mxu0 0.0
    %414 = vmatpush1.msra.mxu0 %v168
    %415 = vmatprep.subr.mxu0 0.0
    %416 = vmatpush1.msra.mxu0 %v169
    %417 = vmatprep.subr.mxu0 0.0
    %418 = vmatpush1.msra.mxu0 %v170
    %419 = vmatprep.subr.mxu0 0.0
    %420 = vmatpush1.msra.mxu0 %v171
    %421 = vmatprep.subr.mxu0 0.0
    %422 = vmatpush1.msra.mxu0 %v172
    %423 = vmatprep.subr.mxu0 0.0
    %424 = vmatpush1.msra.mxu0 %v173
    %425 = vmatprep.subr.mxu0 0.0
    %426 = vmatpush1.msra.mxu0 %v174
    %427 = vmatprep.subr.mxu0 0.0
    %428 = vmatpush1.msra.mxu0 %v175
    %429 = vmatprep.subr.mxu0 0.0
    %430 = vmatpush1.msra.mxu0 %v176
    %431 = vmatprep.subr.mxu0 0.0
    %432 = vmatpush1.msra.mxu0 0.0
    %433 = vmatprep.subr.mxu0 0.0
    %434 = vmatpush1.msra.mxu0 0.0
    %435 = vmatprep.subr.mxu0 0.0
    %436 = vmatpush1.msra.mxu0 0.0
    %437 = vmatprep.subr.mxu0 0.0
    %438 = vmatpush1.msra.mxu0 0.0
    %439 = vmatprep.subr.mxu0 0.0
    %440 = vmatpush1.msra.mxu0 0.0
    %441 = vmatprep.subr.mxu0 0.0
    %442 = vmatpush1.msra.mxu0 0.0
    %443 = vmatprep.subr.mxu0 0.0
    %444 = vmatpush1.msra.mxu0 0.0
    %445 = vmatprep.subr.mxu0 0.0
    %446 = vmatpush1.msra.mxu0 0.0
    %447 = vmatprep.subr.mxu0 0.0
    %448 = vmatpush1.msra.mxu0 0.0
    %449 = vmatprep.subr.mxu0 0.0
    %450 = vmatpush1.msra.mxu0 0.0
    %451 = vmatprep.subr.mxu0 0.0
    %452 = vmatpush1.msra.mxu0 0.0
    %453 = vmatprep.subr.mxu0 0.0
    %454 = vmatpush1.msra.mxu0 0.0
    %455 = vmatprep.subr.mxu0 0.0
    %456 = vmatpush1.msra.mxu0 0.0
    %457 = vmatprep.subr.mxu0 0.0
    %458 = vmatpush1.msra.mxu0 0.0
    %459 = vmatprep.subr.mxu0 0.0
    %460 = vmatpush1.msra.mxu0 0.0
    %461 = vmatprep.subr.mxu0 0.0
    %462 = vmatpush1.msra.mxu0 0.0
    %463 = vmatprep.mubr.f32.mxu0 0.0
    %464 = vmatmul.mubr.f32.gmra.mrb[0].mxu0 %v398
    %v465 = vpop.f32.mrb[0].mxu0
    %v466 = vadd.f32 %v183, %v465
    %v467 = vpop.f32.mrb[0].mxu0
    %468 = vdwg.mxu0
    %v469 = vadd.f32 %v326, %v466
    %s470 = scalar_lea.vmem %s9, 8
    %471 = vst [vmem:[%s470] sm:$0xff] %v469
    %472 = vmatprep.subr.mxu0 0.0
    %473 = vmatpush1.msra.mxu0 %v122
    %474 = vmatprep.subr.mxu0 0.0
    %475 = vmatpush1.msra.mxu0 %v123
    %476 = vmatprep.subr.mxu0 0.0
    %477 = vmatpush1.msra.mxu0 %v124
    %478 = vmatprep.subr.mxu0 0.0
    %479 = vmatpush1.msra.mxu0 %v125
    %480 = vmatprep.subr.mxu0 0.0
    %481 = vmatpush1.msra.mxu0 %v126
    %482 = vmatprep.subr.mxu0 0.0
    %483 = vmatpush1.msra.mxu0 %v127
    %484 = vmatprep.subr.mxu0 0.0
    %485 = vmatpush1.msra.mxu0 %v128
    %486 = vmatprep.subr.mxu0 0.0
    %487 = vmatpush1.msra.mxu0 %v129
    %488 = vmatprep.subr.mxu0 0.0
    %489 = vmatpush1.msra.mxu0 %v130
    %490 = vmatprep.subr.mxu0 0.0
    %491 = vmatpush1.msra.mxu0 %v131
    %492 = vmatprep.subr.mxu0 0.0
    %493 = vmatpush1.msra.mxu0 %v132
    %494 = vmatprep.subr.mxu0 0.0
    %495 = vmatpush1.msra.mxu0 %v133
    %496 = vmatprep.subr.mxu0 0.0
    %497 = vmatpush1.msra.mxu0 %v134
    %498 = vmatprep.subr.mxu0 0.0
    %499 = vmatpush1.msra.mxu0 %v135
    %500 = vmatprep.subr.mxu0 0.0
    %501 = vmatpush1.msra.mxu0 %v136
    %502 = vmatprep.subr.mxu0 0.0
    %503 = vmatpush1.msra.mxu0 %v137
    %504 = vmatprep.subr.mxu0 0.0
    %505 = vmatpush1.msra.mxu0 0.0
    %506 = vmatprep.subr.mxu0 0.0
    %507 = vmatpush1.msra.mxu0 0.0
    %508 = vmatprep.subr.mxu0 0.0
    %509 = vmatpush1.msra.mxu0 0.0
    %510 = vmatprep.subr.mxu0 0.0
    %511 = vmatpush1.msra.mxu0 0.0
    %512 = vmatprep.subr.mxu0 0.0
    %513 = vmatpush1.msra.mxu0 0.0
    %514 = vmatprep.subr.mxu0 0.0
    %515 = vmatpush1.msra.mxu0 0.0
    %516 = vmatprep.subr.mxu0 0.0
    %517 = vmatpush1.msra.mxu0 0.0
    %518 = vmatprep.subr.mxu0 0.0
    %519 = vmatpush1.msra.mxu0 0.0
    %520 = vmatprep.subr.mxu0 0.0
    %521 = vmatpush1.msra.mxu0 0.0
    %522 = vmatprep.subr.mxu0 0.0
    %523 = vmatpush1.msra.mxu0 0.0
    %524 = vmatprep.subr.mxu0 0.0
    %525 = vmatpush1.msra.mxu0 0.0
    %526 = vmatprep.subr.mxu0 0.0
    %527 = vmatpush1.msra.mxu0 0.0
    %528 = vmatprep.subr.mxu0 0.0
    %529 = vmatpush1.msra.mxu0 0.0
    %530 = vmatprep.subr.mxu0 0.0
    %531 = vmatpush1.msra.mxu0 0.0
    %532 = vmatprep.subr.mxu0 0.0
    %533 = vmatpush1.msra.mxu0 0.0
    %534 = vmatprep.subr.mxu0 0.0
    %535 = vmatpush1.msra.mxu0 0.0
    %536 = vmatprep.mubr.f32.mxu0 0.0
    %537 = vmatmul.mubr.f32.gmra.mrb[0].mxu0 %v469
    %v538 = vpop.f32.mrb[0].mxu0
    %v539 = vadd.f32 %v143, %v538
    %v540 = vpop.f32.mrb[0].mxu0
    %541 = vdwg.mxu0
    %v542 = vtanh.pop %v539
    %543 = vmatprep.subr.mxu0 0.0
    %544 = vmatpush1.msra.mxu0 %v161
    %545 = vmatprep.subr.mxu0 0.0
    %546 = vmatpush1.msra.mxu0 %v162
    %547 = vmatprep.subr.mxu0 0.0
    %548 = vmatpush1.msra.mxu0 %v163
    %549 = vmatprep.subr.mxu0 0.0
    %550 = vmatpush1.msra.mxu0 %v164
    %551 = vmatprep.subr.mxu0 0.0
    %552 = vmatpush1.msra.mxu0 %v165
    %553 = vmatprep.subr.mxu0 0.0
    %554 = vmatpush1.msra.mxu0 %v166
    %555 = vmatprep.subr.mxu0 0.0
    %556 = vmatpush1.msra.mxu0 %v167
    %557 = vmatprep.subr.mxu0 0.0
    %558 = vmatpush1.msra.mxu0 %v168
    %559 = vmatprep.subr.mxu0 0.0
    %560 = vmatpush1.msra.mxu0 %v169
    %561 = vmatprep.subr.mxu0 0.0
    %562 = vmatpush1.msra.mxu0 %v170
    %563 = vmatprep.subr.mxu0 0.0
    %564 = vmatpush1.msra.mxu0 %v171
    %565 = vmatprep.subr.mxu0 0.0
    %566 = vmatpush1.msra.mxu0 %v172
    %567 = vmatprep.subr.mxu0 0.0
    %568 = vmatpush1.msra.mxu0 %v173
    %569 = vmatprep.subr.mxu0 0.0
    %570 = vmatpush1.msra.mxu0 %v174
    %571 = vmatprep.subr.mxu0 0.0
    %572 = vmatpush1.msra.mxu0 %v175
    %573 = vmatprep.subr.mxu0 0.0
    %574 = vmatpush1.msra.mxu0 %v176
    %575 = vmatprep.subr.mxu0 0.0
    %576 = vmatpush1.msra.mxu0 0.0
    %577 = vmatprep.subr.mxu0 0.0
    %578 = vmatpush1.msra.mxu0 0.0
    %579 = vmatprep.subr.mxu0 0.0
    %580 = vmatpush1.msra.mxu0 0.0
    %581 = vmatprep.subr.mxu0 0.0
    %582 = vmatpush1.msra.mxu0 0.0
    %583 = vmatprep.subr.mxu0 0.0
    %584 = vmatpush1.msra.mxu0 0.0
    %585 = vmatprep.subr.mxu0 0.0
    %586 = vmatpush1.msra.mxu0 0.0
    %587 = vmatprep.subr.mxu0 0.0
    %588 = vmatpush1.msra.mxu0 0.0
    %589 = vmatprep.subr.mxu0 0.0
    %590 = vmatpush1.msra.mxu0 0.0
    %591 = vmatprep.subr.mxu0 0.0
    %592 = vmatpush1.msra.mxu0 0.0
    %593 = vmatprep.subr.mxu0 0.0
    %594 = vmatpush1.msra.mxu0 0.0
    %595 = vmatprep.subr.mxu0 0.0
    %596 = vmatpush1.msra.mxu0 0.0
    %597 = vmatprep.subr.mxu0 0.0
    %598 = vmatpush1.msra.mxu0 0.0
    %599 = vmatprep.subr.mxu0 0.0
    %600 = vmatpush1.msra.mxu0 0.0
    %601 = vmatprep.subr.mxu0 0.0
    %602 = vmatpush1.msra.mxu0 0.0
    %603 = vmatprep.subr.mxu0 0.0
    %604 = vmatpush1.msra.mxu0 0.0
    %605 = vmatprep.subr.mxu0 0.0
    %606 = vmatpush1.msra.mxu0 0.0
    %607 = vmatprep.mubr.f32.mxu0 0.0
    %608 = vmatmul.mubr.f32.gmra.mrb[0].mxu0 %v542
    %v609 = vpop.f32.mrb[0].mxu0
    %v610 = vadd.f32 %v183, %v609
    %v611 = vpop.f32.mrb[0].mxu0
    %612 = vdwg.mxu0
    %v613 = vadd.f32 %v469, %v610
    %s614 = scalar_lea.vmem %s9, 16
    %615 = vst [vmem:[%s614] sm:$0xff] %v613
    %616 = vmatprep.subr.mxu0 0.0
    %617 = vmatpush1.msra.mxu0 %v122
    %618 = vmatprep.subr.mxu0 0.0
    %619 = vmatpush1.msra.mxu0 %v123
    %620 = vmatprep.subr.mxu0 0.0
    %621 = vmatpush1.msra.mxu0 %v124
    %622 = vmatprep.subr.mxu0 0.0
    %623 = vmatpush1.msra.mxu0 %v125
    %624 = vmatprep.subr.mxu0 0.0
    %625 = vmatpush1.msra.mxu0 %v126
    %626 = vmatprep.subr.mxu0 0.0
    %627 = vmatpush1.msra.mxu0 %v127
    %628 = vmatprep.subr.mxu0 0.0
    %629 = vmatpush1.msra.mxu0 %v128
    %630 = vmatprep.subr.mxu0 0.0
    %631 = vmatpush1.msra.mxu0 %v129
    %632 = vmatprep.subr.mxu0 0.0
    %633 = vmatpush1.msra.mxu0 %v130
    %634 = vmatprep.subr.mxu0 0.0
    %635 = vmatpush1.msra.mxu0 %v131
    %636 = vmatprep.subr.mxu0 0.0
    %637 = vmatpush1.msra.mxu0 %v132
    %638 = vmatprep.subr.mxu0 0.0
    %639 = vmatpush1.msra.mxu0 %v133
    %640 = vmatprep.subr.mxu0 0.0
    %641 = vmatpush1.msra.mxu0 %v134
    %642 = vmatprep.subr.mxu0 0.0
    %643 = vmatpush1.msra.mxu0 %v135
    %644 = vmatprep.subr.mxu0 0.0
    %645 = vmatpush1.msra.mxu0 %v136
    %646 = vmatprep.subr.mxu0 0.0
    %647 = vmatpush1.msra.mxu0 %v137
    %648 = vmatprep.subr.mxu0 0.0
    %649 = vmatpush1.msra.mxu0 0.0
    %650 = vmatprep.subr.mxu0 0.0
    %651 = vmatpush1.msra.mxu0 0.0
    %652 = vmatprep.subr.mxu0 0.0
    %653 = vmatpush1.msra.mxu0 0.0
    %654 = vmatprep.subr.mxu0 0.0
    %655 = vmatpush1.msra.mxu0 0.0
    %656 = vmatprep.subr.mxu0 0.0
    %657 = vmatpush1.msra.mxu0 0.0
    %658 = vmatprep.subr.mxu0 0.0
    %659 = vmatpush1.msra.mxu0 0.0
    %660 = vmatprep.subr.mxu0 0.0
    %661 = vmatpush1.msra.mxu0 0.0
    %662 = vmatprep.subr.mxu0 0.0
    %663 = vmatpush1.msra.mxu0 0.0
    %664 = vmatprep.subr.mxu0 0.0
    %665 = vmatpush1.msra.mxu0 0.0
    %666 = vmatprep.subr.mxu0 0.0
    %667 = vmatpush1.msra.mxu0 0.0
    %668 = vmatprep.subr.mxu0 0.0
    %669 = vmatpush1.msra.mxu0 0.0
    %670 = vmatprep.subr.mxu0 0.0
    %671 = vmatpush1.msra.mxu0 0.0
    %672 = vmatprep.subr.mxu0 0.0
    %673 = vmatpush1.msra.mxu0 0.0
    %674 = vmatprep.subr.mxu0 0.0
    %675 = vmatpush1.msra.mxu0 0.0
    %676 = vmatprep.subr.mxu0 0.0
    %677 = vmatpush1.msra.mxu0 0.0
    %678 = vmatprep.subr.mxu0 0.0
    %679 = vmatpush1.msra.mxu0 0.0
    %680 = vmatprep.mubr.f32.mxu0 0.0
    %681 = vmatmul.mubr.f32.gmra.mrb[0].mxu0 %v613
    %v682 = vpop.f32.mrb[0].mxu0
    %v683 = vadd.f32 %v143, %v682
    %v684 = vpop.f32.mrb[0].mxu0
    %685 = vdwg.mxu0
    %v686 = vtanh.pop %v683
    %687 = vmatprep.subr.mxu0 0.0
    %688 = vmatpush1.msra.mxu0 %v161
    %689 = vmatprep.subr.mxu0 0.0
    %690 = vmatpush1.msra.mxu0 %v162
    %691 = vmatprep.subr.mxu0 0.0
    %692 = vmatpush1.msra.mxu0 %v163
    %693 = vmatprep.subr.mxu0 0.0
    %694 = vmatpush1.msra.mxu0 %v164
    %695 = vmatprep.subr.mxu0 0.0
    %696 = vmatpush1.msra.mxu0 %v165
    %697 = vmatprep.subr.mxu0 0.0
    %698 = vmatpush1.msra.mxu0 %v166
    %699 = vmatprep.subr.mxu0 0.0
    %700 = vmatpush1.msra.mxu0 %v167
    %701 = vmatprep.subr.mxu0 0.0
    %702 = vmatpush1.msra.mxu0 %v168
    %703 = vmatprep.subr.mxu0 0.0
    %704 = vmatpush1.msra.mxu0 %v169
    %705 = vmatprep.subr.mxu0 0.0
    %706 = vmatpush1.msra.mxu0 %v170
    %707 = vmatprep.subr.mxu0 0.0
    %708 = vmatpush1.msra.mxu0 %v171
    %709 = vmatprep.subr.mxu0 0.0
    %710 = vmatpush1.msra.mxu0 %v172
    %711 = vmatprep.subr.mxu0 0.0
    %712 = vmatpush1.msra.mxu0 %v173
    %713 = vmatprep.subr.mxu0 0.0
    %714 = vmatpush1.msra.mxu0 %v174
    %715 = vmatprep.subr.mxu0 0.0
    %716 = vmatpush1.msra.mxu0 %v175
    %717 = vmatprep.subr.mxu0 0.0
    %718 = vmatpush1.msra.mxu0 %v176
    %719 = vmatprep.subr.mxu0 0.0
    %720 = vmatpush1.msra.mxu0 0.0
    %721 = vmatprep.subr.mxu0 0.0
    %722 = vmatpush1.msra.mxu0 0.0
    %723 = vmatprep.subr.mxu0 0.0
    %724 = vmatpush1.msra.mxu0 0.0
    %725 = vmatprep.subr.mxu0 0.0
    %726 = vmatpush1.msra.mxu0 0.0
    %727 = vmatprep.subr.mxu0 0.0
    %728 = vmatpush1.msra.mxu0 0.0
    %729 = vmatprep.subr.mxu0 0.0
    %730 = vmatpush1.msra.mxu0 0.0
    %731 = vmatprep.subr.mxu0 0.0
    %732 = vmatpush1.msra.mxu0 0.0
    %733 = vmatprep.subr.mxu0 0.0
    %734 = vmatpush1.msra.mxu0 0.0
    %735 = vmatprep.subr.mxu0 0.0
    %736 = vmatpush1.msra.mxu0 0.0
    %737 = vmatprep.subr.mxu0 0.0
    %738 = vmatpush1.msra.mxu0 0.0
    %739 = vmatprep.subr.mxu0 0.0
    %740 = vmatpush1.msra.mxu0 0.0
    %741 = vmatprep.subr.mxu0 0.0
    %742 = vmatpush1.msra.mxu0 0.0
    %743 = vmatprep.subr.mxu0 0.0
    %744 = vmatpush1.msra.mxu0 0.0
    %745 = vmatprep.subr.mxu0 0.0
    %746 = vmatpush1.msra.mxu0 0.0
    %747 = vmatprep.subr.mxu0 0.0
    %748 = vmatpush1.msra.mxu0 0.0
    %749 = vmatprep.subr.mxu0 0.0
    %750 = vmatpush1.msra.mxu0 0.0
    %751 = vmatprep.mubr.f32.mxu0 0.0
    %752 = vmatmul.mubr.f32.gmra.mrb[0].mxu0 %v686
    %v753 = vpop.f32.mrb[0].mxu0
    %v754 = vadd.f32 %v183, %v753
    %v755 = vpop.f32.mrb[0].mxu0
    %756 = vdwg.mxu0
    %v757 = vadd.f32 %v613, %v754
    %s758 = scalar_lea.vmem %s9, 24
    %759 = vst [vmem:[%s758] sm:$0xff] %v757
    %760 = vmatprep.subr.mxu0 0.0
    %761 = vmatpush1.msra.mxu0 %v122
    %762 = vmatprep.subr.mxu0 0.0
    %763 = vmatpush1.msra.mxu0 %v123
    %764 = vmatprep.subr.mxu0 0.0
    %765 = vmatpush1.msra.mxu0 %v124
    %766 = vmatprep.subr.mxu0 0.0
    %767 = vmatpush1.msra.mxu0 %v125
    %768 = vmatprep.subr.mxu0 0.0
    %769 = vmatpush1.msra.mxu0 %v126
    %770 = vmatprep.subr.mxu0 0.0
    %771 = vmatpush1.msra.mxu0 %v127
    %772 = vmatprep.subr.mxu0 0.0
    %773 = vmatpush1.msra.mxu0 %v128
    %774 = vmatprep.subr.mxu0 0.0
    %775 = vmatpush1.msra.mxu0 %v129
    %776 = vmatprep.subr.mxu0 0.0
    %777 = vmatpush1.msra.mxu0 %v130
    %778 = vmatprep.subr.mxu0 0.0
    %779 = vmatpush1.msra.mxu0 %v131
    %780 = vmatprep.subr.mxu0 0.0
    %781 = vmatpush1.msra.mxu0 %v132
    %782 = vmatprep.subr.mxu0 0.0
    %783 = vmatpush1.msra.mxu0 %v133
    %784 = vmatprep.subr.mxu0 0.0
    %785 = vmatpush1.msra.mxu0 %v134
    %786 = vmatprep.subr.mxu0 0.0
    %787 = vmatpush1.msra.mxu0 %v135
    %788 = vmatprep.subr.mxu0 0.0
    %789 = vmatpush1.msra.mxu0 %v136
    %790 = vmatprep.subr.mxu0 0.0
    %791 = vmatpush1.msra.mxu0 %v137
    %792 = vmatprep.subr.mxu0 0.0
    %793 = vmatpush1.msra.mxu0 0.0
    %794 = vmatprep.subr.mxu0 0.0
    %795 = vmatpush1.msra.mxu0 0.0
    %796 = vmatprep.subr.mxu0 0.0
    %797 = vmatpush1.msra.mxu0 0.0
    %798 = vmatprep.subr.mxu0 0.0
    %799 = vmatpush1.msra.mxu0 0.0
    %800 = vmatprep.subr.mxu0 0.0
    %801 = vmatpush1.msra.mxu0 0.0
    %802 = vmatprep.subr.mxu0 0.0
    %803 = vmatpush1.msra.mxu0 0.0
    %804 = vmatprep.subr.mxu0 0.0
    %805 = vmatpush1.msra.mxu0 0.0
    %806 = vmatprep.subr.mxu0 0.0
    %807 = vmatpush1.msra.mxu0 0.0
    %808 = vmatprep.subr.mxu0 0.0
    %809 = vmatpush1.msra.mxu0 0.0
    %810 = vmatprep.subr.mxu0 0.0
    %811 = vmatpush1.msra.mxu0 0.0
    %812 = vmatprep.subr.mxu0 0.0
    %813 = vmatpush1.msra.mxu0 0.0
    %814 = vmatprep.subr.mxu0 0.0
    %815 = vmatpush1.msra.mxu0 0.0
    %816 = vmatprep.subr.mxu0 0.0
    %817 = vmatpush1.msra.mxu0 0.0
    %818 = vmatprep.subr.mxu0 0.0
    %819 = vmatpush1.msra.mxu0 0.0
    %820 = vmatprep.subr.mxu0 0.0
    %821 = vmatpush1.msra.mxu0 0.0
    %822 = vmatprep.subr.mxu0 0.0
    %823 = vmatpush1.msra.mxu0 0.0
    %824 = vmatprep.mubr.f32.mxu0 0.0
    %825 = vmatmul.mubr.f32.gmra.mrb[0].mxu0 %v757
    %v826 = vpop.f32.mrb[0].mxu0
    %v827 = vadd.f32 %v143, %v826
    %v828 = vpop.f32.mrb[0].mxu0
    %829 = vdwg.mxu0
    %v830 = vtanh.pop %v827
    %831 = vmatprep.subr.mxu0 0.0
    %832 = vmatpush1.msra.mxu0 %v161
    %833 = vmatprep.subr.mxu0 0.0
    %834 = vmatpush1.msra.mxu0 %v162
    %835 = vmatprep.subr.mxu0 0.0
    %836 = vmatpush1.msra.mxu0 %v163
    %837 = vmatprep.subr.mxu0 0.0
    %838 = vmatpush1.msra.mxu0 %v164
    %839 = vmatprep.subr.mxu0 0.0
    %840 = vmatpush1.msra.mxu0 %v165
    %841 = vmatprep.subr.mxu0 0.0
    %842 = vmatpush1.msra.mxu0 %v166
    %843 = vmatprep.subr.mxu0 0.0
    %844 = vmatpush1.msra.mxu0 %v167
    %845 = vmatprep.subr.mxu0 0.0
    %846 = vmatpush1.msra.mxu0 %v168
    %847 = vmatprep.subr.mxu0 0.0
    %848 = vmatpush1.msra.mxu0 %v169
    %849 = vmatprep.subr.mxu0 0.0
    %850 = vmatpush1.msra.mxu0 %v170
    %851 = vmatprep.subr.mxu0 0.0
    %852 = vmatpush1.msra.mxu0 %v171
    %853 = vmatprep.subr.mxu0 0.0
    %854 = vmatpush1.msra.mxu0 %v172
    %855 = vmatprep.subr.mxu0 0.0
    %856 = vmatpush1.msra.mxu0 %v173
    %857 = vmatprep.subr.mxu0 0.0
    %858 = vmatpush1.msra.mxu0 %v174
    %859 = vmatprep.subr.mxu0 0.0
    %860 = vmatpush1.msra.mxu0 %v175
    %861 = vmatprep.subr.mxu0 0.0
    %862 = vmatpush1.msra.mxu0 %v176
    %863 = vmatprep.subr.mxu0 0.0
    %864 = vmatpush1.msra.mxu0 0.0
    %865 = vmatprep.subr.mxu0 0.0
    %866 = vmatpush1.msra.mxu0 0.0
    %867 = vmatprep.subr.mxu0 0.0
    %868 = vmatpush1.msra.mxu0 0.0
    %869 = vmatprep.subr.mxu0 0.0
    %870 = vmatpush1.msra.mxu0 0.0
    %871 = vmatprep.subr.mxu0 0.0
    %872 = vmatpush1.msra.mxu0 0.0
    %873 = vmatprep.subr.mxu0 0.0
    %874 = vmatpush1.msra.mxu0 0.0
    %875 = vmatprep.subr.mxu0 0.0
    %876 = vmatpush1.msra.mxu0 0.0
    %877 = vmatprep.subr.mxu0 0.0
    %878 = vmatpush1.msra.mxu0 0.0
    %879 = vmatprep.subr.mxu0 0.0
    %880 = vmatpush1.msra.mxu0 0.0
    %881 = vmatprep.subr.mxu0 0.0
    %882 = vmatpush1.msra.mxu0 0.0
    %883 = vmatprep.subr.mxu0 0.0
    %884 = vmatpush1.msra.mxu0 0.0
    %885 = vmatprep.subr.mxu0 0.0
    %886 = vmatpush1.msra.mxu0 0.0
    %887 = vmatprep.subr.mxu0 0.0
    %888 = vmatpush1.msra.mxu0 0.0
    %889 = vmatprep.subr.mxu0 0.0
    %890 = vmatpush1.msra.mxu0 0.0
    %891 = vmatprep.subr.mxu0 0.0
    %892 = vmatpush1.msra.mxu0 0.0
    %893 = vmatprep.subr.mxu0 0.0
    %894 = vmatpush1.msra.mxu0 0.0
    %895 = vmatprep.mubr.f32.mxu0 0.0
    %896 = vmatmul.mubr.f32.gmra.mrb[0].mxu0 %v830
    %v897 = vpop.f32.mrb[0].mxu0
    %v898 = vadd.f32 %v183, %v897
    %v899 = vpop.f32.mrb[0].mxu0
    %900 = vdwg.mxu0
    %v901 = vadd.f32 %v757, %v898
    %s902 = scalar_lea.vmem %s9, 32
    %903 = vst [vmem:[%s902] sm:$0xff] %v901
    %904 = vmatprep.subr.mxu0 0.0
    %905 = vmatpush1.msra.mxu0 %v122
    %906 = vmatprep.subr.mxu0 0.0
    %907 = vmatpush1.msra.mxu0 %v123
    %908 = vmatprep.subr.mxu0 0.0
    %909 = vmatpush1.msra.mxu0 %v124
    %910 = vmatprep.subr.mxu0 0.0
    %911 = vmatpush1.msra.mxu0 %v125
    %912 = vmatprep.subr.mxu0 0.0
    %913 = vmatpush1.msra.mxu0 %v126
    %914 = vmatprep.subr.mxu0 0.0
    %915 = vmatpush1.msra.mxu0 %v127
    %916 = vmatprep.subr.mxu0 0.0
    %917 = vmatpush1.msra.mxu0 %v128
    %918 = vmatprep.subr.mxu0 0.0
    %919 = vmatpush1.msra.mxu0 %v129
    %920 = vmatprep.subr.mxu0 0.0
    %921 = vmatpush1.msra.mxu0 %v130
    %922 = vmatprep.subr.mxu0 0.0
    %923 = vmatpush1.msra.mxu0 %v131
    %924 = vmatprep.subr.mxu0 0.0
    %925 = vmatpush1.msra.mxu0 %v132
    %926 = vmatprep.subr.mxu0 0.0
    %927 = vmatpush1.msra.mxu0 %v133
    %928 = vmatprep.subr.mxu0 0.0
    %929 = vmatpush1.msra.mxu0 %v134
    %930 = vmatprep.subr.mxu0 0.0
    %931 = vmatpush1.msra.mxu0 %v135
    %932 = vmatprep.subr.mxu0 0.0
    %933 = vmatpush1.msra.mxu0 %v136
    %934 = vmatprep.subr.mxu0 0.0
    %935 = vmatpush1.msra.mxu0 %v137
    %936 = vmatprep.subr.mxu0 0.0
    %937 = vmatpush1.msra.mxu0 0.0
    %938 = vmatprep.subr.mxu0 0.0
    %939 = vmatpush1.msra.mxu0 0.0
    %940 = vmatprep.subr.mxu0 0.0
    %941 = vmatpush1.msra.mxu0 0.0
    %942 = vmatprep.subr.mxu0 0.0
    %943 = vmatpush1.msra.mxu0 0.0
    %944 = vmatprep.subr.mxu0 0.0
    %945 = vmatpush1.msra.mxu0 0.0
    %946 = vmatprep.subr.mxu0 0.0
    %947 = vmatpush1.msra.mxu0 0.0
    %948 = vmatprep.subr.mxu0 0.0
    %949 = vmatpush1.msra.mxu0 0.0
    %950 = vmatprep.subr.mxu0 0.0
    %951 = vmatpush1.msra.mxu0 0.0
    %952 = vmatprep.subr.mxu0 0.0
    %953 = vmatpush1.msra.mxu0 0.0
    %954 = vmatprep.subr.mxu0 0.0
    %955 = vmatpush1.msra.mxu0 0.0
    %956 = vmatprep.subr.mxu0 0.0
    %957 = vmatpush1.msra.mxu0 0.0
    %958 = vmatprep.subr.mxu0 0.0
    %959 = vmatpush1.msra.mxu0 0.0
    %960 = vmatprep.subr.mxu0 0.0
    %961 = vmatpush1.msra.mxu0 0.0
    %962 = vmatprep.subr.mxu0 0.0
    %963 = vmatpush1.msra.mxu0 0.0
    %964 = vmatprep.subr.mxu0 0.0
    %965 = vmatpush1.msra.mxu0 0.0
    %966 = vmatprep.subr.mxu0 0.0
    %967 = vmatpush1.msra.mxu0 0.0
    %968 = vmatprep.mubr.f32.mxu0 0.0
    %969 = vmatmul.mubr.f32.gmra.mrb[0].mxu0 %v901
    %v970 = vpop.f32.mrb[0].mxu0
    %v971 = vadd.f32 %v143, %v970
    %v972 = vpop.f32.mrb[0].mxu0
    %973 = vdwg.mxu0
    %v974 = vtanh.pop %v971
    %975 = vmatprep.subr.mxu0 0.0
    %976 = vmatpush1.msra.mxu0 %v161
    %977 = vmatprep.subr.mxu0 0.0
    %978 = vmatpush1.msra.mxu0 %v162
    %979 = vmatprep.subr.mxu0 0.0
    %980 = vmatpush1.msra.mxu0 %v163
    %981 = vmatprep.subr.mxu0 0.0
    %982 = vmatpush1.msra.mxu0 %v164
    %983 = vmatprep.subr.mxu0 0.0
    %984 = vmatpush1.msra.mxu0 %v165
    %985 = vmatprep.subr.mxu0 0.0
    %986 = vmatpush1.msra.mxu0 %v166
    %987 = vmatprep.subr.mxu0 0.0
    %988 = vmatpush1.msra.mxu0 %v167
    %989 = vmatprep.subr.mxu0 0.0
    %990 = vmatpush1.msra.mxu0 %v168
    %991 = vmatprep.subr.mxu0 0.0
    %992 = vmatpush1.msra.mxu0 %v169
    %993 = vmatprep.subr.mxu0 0.0
    %994 = vmatpush1.msra.mxu0 %v170
    %995 = vmatprep.subr.mxu0 0.0
    %996 = vmatpush1.msra.mxu0 %v171
    %997 = vmatprep.subr.mxu0 0.0
    %998 = vmatpush1.msra.mxu0 %v172
    %999 = vmatprep.subr.mxu0 0.0
    %1000 = vmatpush1.msra.mxu0 %v173
    %1001 = vmatprep.subr.mxu0 0.0
    %1002 = vmatpush1.msra.mxu0 %v174
    %1003 = vmatprep.subr.mxu0 0.0
    %1004 = vmatpush1.msra.mxu0 %v175
    %1005 = vmatprep.subr.mxu0 0.0
    %1006 = vmatpush1.msra.mxu0 %v176
    %1007 = vmatprep.subr.mxu0 0.0
    %1008 = vmatpush1.msra.mxu0 0.0
    %1009 = vmatprep.subr.mxu0 0.0
    %1010 = vmatpush1.msra.mxu0 0.0
    %1011 = vmatprep.subr.mxu0 0.0
    %1012 = vmatpush1.msra.mxu0 0.0
    %1013 = vmatprep.subr.mxu0 0.0
    %1014 = vmatpush1.msra.mxu0 0.0
    %1015 = vmatprep.subr.mxu0 0.0
    %1016 = vmatpush1.msra.mxu0 0.0
    %1017 = vmatprep.subr.mxu0 0.0
    %1018 = vmatpush1.msra.mxu0 0.0
    %1019 = vmatprep.subr.mxu0 0.0
    %1020 = vmatpush1.msra.mxu0 0.0
    %1021 = vmatprep.subr.mxu0 0.0
    %1022 = vmatpush1.msra.mxu0 0.0
    %1023 = vmatprep.subr.mxu0 0.0
    %1024 = vmatpush1.msra.mxu0 0.0
    %1025 = vmatprep.subr.mxu0 0.0
    %1026 = vmatpush1.msra.mxu0 0.0
    %1027 = vmatprep.subr.mxu0 0.0
    %1028 = vmatpush1.msra.mxu0 0.0
    %1029 = vmatprep.subr.mxu0 0.0
    %1030 = vmatpush1.msra.mxu0 0.0
    %1031 = vmatprep.subr.mxu0 0.0
    %1032 = vmatpush1.msra.mxu0 0.0
    %1033 = vmatprep.subr.mxu0 0.0
    %1034 = vmatpush1.msra.mxu0 0.0
    %1035 = vmatprep.subr.mxu0 0.0
    %1036 = vmatpush1.msra.mxu0 0.0
    %1037 = vmatprep.subr.mxu0 0.0
    %1038 = vmatpush1.msra.mxu0 0.0
    %1039 = vmatprep.mubr.f32.mxu0 0.0
    %1040 = vmatmul.mubr.f32.gmra.mrb[0].mxu0 %v974
    %v1041 = vpop.f32.mrb[0].mxu0
    %v1042 = vadd.f32 %v183, %v1041
    %v1043 = vpop.f32.mrb[0].mxu0
    %1044 = vdwg.mxu0
    %v1045 = vadd.f32 %v901, %v1042
    %s1046 = scalar_lea.vmem %s9, 40
    %1047 = vst [vmem:[%s1046] sm:$0xff] %v1045
    %1048 = vmatprep.subr.mxu0 0.0
    %1049 = vmatpush1.msra.mxu0 %v122
    %1050 = vmatprep.subr.mxu0 0.0
    %1051 = vmatpush1.msra.mxu0 %v123
    %1052 = vmatprep.subr.mxu0 0.0
    %1053 = vmatpush1.msra.mxu0 %v124
    %1054 = vmatprep.subr.mxu0 0.0
    %1055 = vmatpush1.msra.mxu0 %v125
    %1056 = vmatprep.subr.mxu0 0.0
    %1057 = vmatpush1.msra.mxu0 %v126
    %1058 = vmatprep.subr.mxu0 0.0
    %1059 = vmatpush1.msra.mxu0 %v127
    %1060 = vmatprep.subr.mxu0 0.0
    %1061 = vmatpush1.msra.mxu0 %v128
    %1062 = vmatprep.subr.mxu0 0.0
    %1063 = vmatpush1.msra.mxu0 %v129
    %1064 = vmatprep.subr.mxu0 0.0
    %1065 = vmatpush1.msra.mxu0 %v130
    %1066 = vmatprep.subr.mxu0 0.0
    %1067 = vmatpush1.msra.mxu0 %v131
    %1068 = vmatprep.subr.mxu0 0.0
    %1069 = vmatpush1.msra.mxu0 %v132
    %1070 = vmatprep.subr.mxu0 0.0
    %1071 = vmatpush1.msra.mxu0 %v133
    %1072 = vmatprep.subr.mxu0 0.0
    %1073 = vmatpush1.msra.mxu0 %v134
    %1074 = vmatprep.subr.mxu0 0.0
    %1075 = vmatpush1.msra.mxu0 %v135
    %1076 = vmatprep.subr.mxu0 0.0
    %1077 = vmatpush1.msra.mxu0 %v136
    %1078 = vmatprep.subr.mxu0 0.0
    %1079 = vmatpush1.msra.mxu0 %v137
    %1080 = vmatprep.subr.mxu0 0.0
    %1081 = vmatpush1.msra.mxu0 0.0
    %1082 = vmatprep.subr.mxu0 0.0
    %1083 = vmatpush1.msra.mxu0 0.0
    %1084 = vmatprep.subr.mxu0 0.0
    %1085 = vmatpush1.msra.mxu0 0.0
    %1086 = vmatprep.subr.mxu0 0.0
    %1087 = vmatpush1.msra.mxu0 0.0
    %1088 = vmatprep.subr.mxu0 0.0
    %1089 = vmatpush1.msra.mxu0 0.0
    %1090 = vmatprep.subr.mxu0 0.0
    %1091 = vmatpush1.msra.mxu0 0.0
    %1092 = vmatprep.subr.mxu0 0.0
    %1093 = vmatpush1.msra.mxu0 0.0
    %1094 = vmatprep.subr.mxu0 0.0
    %1095 = vmatpush1.msra.mxu0 0.0
    %1096 = vmatprep.subr.mxu0 0.0
    %1097 = vmatpush1.msra.mxu0 0.0
    %1098 = vmatprep.subr.mxu0 0.0
    %1099 = vmatpush1.msra.mxu0 0.0
    %1100 = vmatprep.subr.mxu0 0.0
    %1101 = vmatpush1.msra.mxu0 0.0
    %1102 = vmatprep.subr.mxu0 0.0
    %1103 = vmatpush1.msra.mxu0 0.0
    %1104 = vmatprep.subr.mxu0 0.0
    %1105 = vmatpush1.msra.mxu0 0.0
    %1106 = vmatprep.subr.mxu0 0.0
    %1107 = vmatpush1.msra.mxu0 0.0
    %1108 = vmatprep.subr.mxu0 0.0
    %1109 = vmatpush1.msra.mxu0 0.0
    %1110 = vmatprep.subr.mxu0 0.0
    %1111 = vmatpush1.msra.mxu0 0.0
    %1112 = vmatprep.mubr.f32.mxu0 0.0
    %1113 = vmatmul.mubr.f32.gmra.mrb[0].mxu0 %v1045
    %v1114 = vpop.f32.mrb[0].mxu0
    %v1115 = vadd.f32 %v143, %v1114
    %v1116 = vpop.f32.mrb[0].mxu0
    %1117 = vdwg.mxu0
    %v1118 = vtanh.pop %v1115
    %1119 = vmatprep.subr.mxu0 0.0
    %1120 = vmatpush1.msra.mxu0 %v161
    %1121 = vmatprep.subr.mxu0 0.0
    %1122 = vmatpush1.msra.mxu0 %v162
    %1123 = vmatprep.subr.mxu0 0.0
    %1124 = vmatpush1.msra.mxu0 %v163
    %1125 = vmatprep.subr.mxu0 0.0
    %1126 = vmatpush1.msra.mxu0 %v164
    %1127 = vmatprep.subr.mxu0 0.0
    %1128 = vmatpush1.msra.mxu0 %v165
    %1129 = vmatprep.subr.mxu0 0.0
    %1130 = vmatpush1.msra.mxu0 %v166
    %1131 = vmatprep.subr.mxu0 0.0
    %1132 = vmatpush1.msra.mxu0 %v167
    %1133 = vmatprep.subr.mxu0 0.0
    %1134 = vmatpush1.msra.mxu0 %v168
    %1135 = vmatprep.subr.mxu0 0.0
    %1136 = vmatpush1.msra.mxu0 %v169
    %1137 = vmatprep.subr.mxu0 0.0
    %1138 = vmatpush1.msra.mxu0 %v170
    %1139 = vmatprep.subr.mxu0 0.0
    %1140 = vmatpush1.msra.mxu0 %v171
    %1141 = vmatprep.subr.mxu0 0.0
    %1142 = vmatpush1.msra.mxu0 %v172
    %1143 = vmatprep.subr.mxu0 0.0
    %1144 = vmatpush1.msra.mxu0 %v173
    %1145 = vmatprep.subr.mxu0 0.0
    %1146 = vmatpush1.msra.mxu0 %v174
    %1147 = vmatprep.subr.mxu0 0.0
    %1148 = vmatpush1.msra.mxu0 %v175
    %1149 = vmatprep.subr.mxu0 0.0
    %1150 = vmatpush1.msra.mxu0 %v176
    %1151 = vmatprep.subr.mxu0 0.0
    %1152 = vmatpush1.msra.mxu0 0.0
    %1153 = vmatprep.subr.mxu0 0.0
    %1154 = vmatpush1.msra.mxu0 0.0
    %1155 = vmatprep.subr.mxu0 0.0
    %1156 = vmatpush1.msra.mxu0 0.0
    %1157 = vmatprep.subr.mxu0 0.0
    %1158 = vmatpush1.msra.mxu0 0.0
    %1159 = vmatprep.subr.mxu0 0.0
    %1160 = vmatpush1.msra.mxu0 0.0
    %1161 = vmatprep.subr.mxu0 0.0
    %1162 = vmatpush1.msra.mxu0 0.0
    %1163 = vmatprep.subr.mxu0 0.0
    %1164 = vmatpush1.msra.mxu0 0.0
    %1165 = vmatprep.subr.mxu0 0.0
    %1166 = vmatpush1.msra.mxu0 0.0
    %1167 = vmatprep.subr.mxu0 0.0
    %1168 = vmatpush1.msra.mxu0 0.0
    %1169 = vmatprep.subr.mxu0 0.0
    %1170 = vmatpush1.msra.mxu0 0.0
    %1171 = vmatprep.subr.mxu0 0.0
    %1172 = vmatpush1.msra.mxu0 0.0
    %1173 = vmatprep.subr.mxu0 0.0
    %1174 = vmatpush1.msra.mxu0 0.0
    %1175 = vmatprep.subr.mxu0 0.0
    %1176 = vmatpush1.msra.mxu0 0.0
    %1177 = vmatprep.subr.mxu0 0.0
    %1178 = vmatpush1.msra.mxu0 0.0
    %1179 = vmatprep.subr.mxu0 0.0
    %1180 = vmatpush1.msra.mxu0 0.0
    %1181 = vmatprep.subr.mxu0 0.0
    %1182 = vmatpush1.msra.mxu0 0.0
    %1183 = vmatprep.mubr.f32.mxu0 0.0
    %1184 = vmatmul.mubr.f32.gmra.mrb[0].mxu0 %v1118
    %v1185 = vpop.f32.mrb[0].mxu0
    %v1186 = vadd.f32 %v183, %v1185
    %v1187 = vpop.f32.mrb[0].mxu0
    %1188 = vdwg.mxu0
    %v1189 = vadd.f32 %v1045, %v1186
    %s1190 = scalar_lea.vmem %s9, 48
    %1191 = vst [vmem:[%s1190] sm:$0xff] %v1189
    %1192 = vmatprep.subr.mxu0 0.0
    %1193 = vmatpush1.msra.mxu0 %v122
    %1194 = vmatprep.subr.mxu0 0.0
    %1195 = vmatpush1.msra.mxu0 %v123
    %1196 = vmatprep.subr.mxu0 0.0
    %1197 = vmatpush1.msra.mxu0 %v124
    %1198 = vmatprep.subr.mxu0 0.0
    %1199 = vmatpush1.msra.mxu0 %v125
    %1200 = vmatprep.subr.mxu0 0.0
    %1201 = vmatpush1.msra.mxu0 %v126
    %1202 = vmatprep.subr.mxu0 0.0
    %1203 = vmatpush1.msra.mxu0 %v127
    %1204 = vmatprep.subr.mxu0 0.0
    %1205 = vmatpush1.msra.mxu0 %v128
    %1206 = vmatprep.subr.mxu0 0.0
    %1207 = vmatpush1.msra.mxu0 %v129
    %1208 = vmatprep.subr.mxu0 0.0
    %1209 = vmatpush1.msra.mxu0 %v130
    %1210 = vmatprep.subr.mxu0 0.0
    %1211 = vmatpush1.msra.mxu0 %v131
    %1212 = vmatprep.subr.mxu0 0.0
    %1213 = vmatpush1.msra.mxu0 %v132
    %1214 = vmatprep.subr.mxu0 0.0
    %1215 = vmatpush1.msra.mxu0 %v133
    %1216 = vmatprep.subr.mxu0 0.0
    %1217 = vmatpush1.msra.mxu0 %v134
    %1218 = vmatprep.subr.mxu0 0.0
    %1219 = vmatpush1.msra.mxu0 %v135
    %1220 = vmatprep.subr.mxu0 0.0
    %1221 = vmatpush1.msra.mxu0 %v136
    %1222 = vmatprep.subr.mxu0 0.0
    %1223 = vmatpush1.msra.mxu0 %v137
    %1224 = vmatprep.subr.mxu0 0.0
    %1225 = vmatpush1.msra.mxu0 0.0
    %1226 = vmatprep.subr.mxu0 0.0
    %1227 = vmatpush1.msra.mxu0 0.0
    %1228 = vmatprep.subr.mxu0 0.0
    %1229 = vmatpush1.msra.mxu0 0.0
    %1230 = vmatprep.subr.mxu0 0.0
    %1231 = vmatpush1.msra.mxu0 0.0
    %1232 = vmatprep.subr.mxu0 0.0
    %1233 = vmatpush1.msra.mxu0 0.0
    %1234 = vmatprep.subr.mxu0 0.0
    %1235 = vmatpush1.msra.mxu0 0.0
    %1236 = vmatprep.subr.mxu0 0.0
    %1237 = vmatpush1.msra.mxu0 0.0
    %1238 = vmatprep.subr.mxu0 0.0
    %1239 = vmatpush1.msra.mxu0 0.0
    %1240 = vmatprep.subr.mxu0 0.0
    %1241 = vmatpush1.msra.mxu0 0.0
    %1242 = vmatprep.subr.mxu0 0.0
    %1243 = vmatpush1.msra.mxu0 0.0
    %1244 = vmatprep.subr.mxu0 0.0
    %1245 = vmatpush1.msra.mxu0 0.0
    %1246 = vmatprep.subr.mxu0 0.0
    %1247 = vmatpush1.msra.mxu0 0.0
    %1248 = vmatprep.subr.mxu0 0.0
    %1249 = vmatpush1.msra.mxu0 0.0
    %1250 = vmatprep.subr.mxu0 0.0
    %1251 = vmatpush1.msra.mxu0 0.0
    %1252 = vmatprep.subr.mxu0 0.0
    %1253 = vmatpush1.msra.mxu0 0.0
    %1254 = vmatprep.subr.mxu0 0.0
    %1255 = vmatpush1.msra.mxu0 0.0
    %1256 = vmatprep.mubr.f32.mxu0 0.0
    %1257 = vmatmul.mubr.f32.gmra.mrb[0].mxu0 %v1189
    %v1258 = vpop.f32.mrb[0].mxu0
    %v1259 = vadd.f32 %v143, %v1258
    %v1260 = vpop.f32.mrb[0].mxu0
    %1261 = vdwg.mxu0
    %v1262 = vtanh.pop %v1259
    %1263 = vmatprep.subr.mxu0 0.0
    %1264 = vmatpush1.msra.mxu0 %v161
    %1265 = vmatprep.subr.mxu0 0.0
    %1266 = vmatpush1.msra.mxu0 %v162
    %1267 = vmatprep.subr.mxu0 0.0
    %1268 = vmatpush1.msra.mxu0 %v163
    %1269 = vmatprep.subr.mxu0 0.0
    %1270 = vmatpush1.msra.mxu0 %v164
    %1271 = vmatprep.subr.mxu0 0.0
    %1272 = vmatpush1.msra.mxu0 %v165
    %1273 = vmatprep.subr.mxu0 0.0
    %1274 = vmatpush1.msra.mxu0 %v166
    %1275 = vmatprep.subr.mxu0 0.0
    %1276 = vmatpush1.msra.mxu0 %v167
    %1277 = vmatprep.subr.mxu0 0.0
    %1278 = vmatpush1.msra.mxu0 %v168
    %1279 = vmatprep.subr.mxu0 0.0
    %1280 = vmatpush1.msra.mxu0 %v169
    %1281 = vmatprep.subr.mxu0 0.0
    %1282 = vmatpush1.msra.mxu0 %v170
    %1283 = vmatprep.subr.mxu0 0.0
    %1284 = vmatpush1.msra.mxu0 %v171
    %1285 = vmatprep.subr.mxu0 0.0
    %1286 = vmatpush1.msra.mxu0 %v172
    %1287 = vmatprep.subr.mxu0 0.0
    %1288 = vmatpush1.msra.mxu0 %v173
    %1289 = vmatprep.subr.mxu0 0.0
    %1290 = vmatpush1.msra.mxu0 %v174
    %1291 = vmatprep.subr.mxu0 0.0
    %1292 = vmatpush1.msra.mxu0 %v175
    %1293 = vmatprep.subr.mxu0 0.0
    %1294 = vmatpush1.msra.mxu0 %v176
    %1295 = vmatprep.subr.mxu0 0.0
    %1296 = vmatpush1.msra.mxu0 0.0
    %1297 = vmatprep.subr.mxu0 0.0
    %1298 = vmatpush1.msra.mxu0 0.0
    %1299 = vmatprep.subr.mxu0 0.0
    %1300 = vmatpush1.msra.mxu0 0.0
    %1301 = vmatprep.subr.mxu0 0.0
    %1302 = vmatpush1.msra.mxu0 0.0
    %1303 = vmatprep.subr.mxu0 0.0
    %1304 = vmatpush1.msra.mxu0 0.0
    %1305 = vmatprep.subr.mxu0 0.0
    %1306 = vmatpush1.msra.mxu0 0.0
    %1307 = vmatprep.subr.mxu0 0.0
    %1308 = vmatpush1.msra.mxu0 0.0
    %1309 = vmatprep.subr.mxu0 0.0
    %1310 = vmatpush1.msra.mxu0 0.0
    %1311 = vmatprep.subr.mxu0 0.0
    %1312 = vmatpush1.msra.mxu0 0.0
    %1313 = vmatprep.subr.mxu0 0.0
    %1314 = vmatpush1.msra.mxu0 0.0
    %1315 = vmatprep.subr.mxu0 0.0
    %1316 = vmatpush1.msra.mxu0 0.0
    %1317 = vmatprep.subr.mxu0 0.0
    %1318 = vmatpush1.msra.mxu0 0.0
    %1319 = vmatprep.subr.mxu0 0.0
    %1320 = vmatpush1.msra.mxu0 0.0
    %1321 = vmatprep.subr.mxu0 0.0
    %1322 = vmatpush1.msra.mxu0 0.0
    %1323 = vmatprep.subr.mxu0 0.0
    %1324 = vmatpush1.msra.mxu0 0.0
    %1325 = vmatprep.subr.mxu0 0.0
    %1326 = vmatpush1.msra.mxu0 0.0
    %1327 = vmatprep.mubr.f32.mxu0 0.0
    %1328 = vmatmul.mubr.f32.gmra.mrb[0].mxu0 %v1262
    %v1329 = vpop.f32.mrb[0].mxu0
    %v1330 = vadd.f32 %v183, %v1329
    %v1331 = vpop.f32.mrb[0].mxu0
    %1332 = vdwg.mxu0
    %v1333 = vadd.f32 %v1189, %v1330
    %s1334 = scalar_lea.vmem %s9, 56
    %1335 = vst [vmem:[%s1334] sm:$0xff] %v1333
    %1336 = vst [vmem:[#allocation2] sm:$0xff] %v1333
    %v1337 = vld [vmem:[%s7] sm:$0xff]
    %v1338 = vld [vmem:[%s7 + $0x8] sm:$0xff]
    %v1339 = vld [vmem:[%s7 + $0x10] sm:$0xff]
    %v1340 = vld [vmem:[%s7 + $0x18] sm:$0xff]
    %v1341 = vld [vmem:[%s7 + $0x20] sm:$0xff]
    %v1342 = vld [vmem:[%s7 + $0x28] sm:$0xff]
    %v1343 = vld [vmem:[%s7 + $0x30] sm:$0xff]
    %v1344 = vld [vmem:[%s7 + $0x38] sm:$0xff]
    %v1345 = vld [vmem:[%s7 + $0x40] sm:$0xff]
    %v1346 = vld [vmem:[%s7 + $0x48] sm:$0xff]
    %v1347 = vld [vmem:[%s7 + $0x50] sm:$0xff]
    %v1348 = vld [vmem:[%s7 + $0x58] sm:$0xff]
    %v1349 = vld [vmem:[%s7 + $0x60] sm:$0xff]
    %v1350 = vld [vmem:[%s7 + $0x68] sm:$0xff]
    %v1351 = vld [vmem:[%s7 + $0x70] sm:$0xff]
    %v1352 = vld [vmem:[%s7 + $0x78] sm:$0xff]
    %v1353 = vld [vmem:[%s8] sm:$0x1]
    %v1355 = vlaneseq
    %v1356 = vshrl.u32 %v1355, 7
    %v1357 = vsub.s32 0, %v1356
    %v1358 = vrot.slane %v1353, %v1357
    %1360 = vmatprep.subr.mxu0 0.0
    %1361 = vmatpush1.msra.mxu0 %v1337
    %1362 = vmatprep.subr.mxu0 0.0
    %1363 = vmatpush1.msra.mxu0 %v1338
    %1364 = vmatprep.subr.mxu0 0.0
    %1365 = vmatpush1.msra.mxu0 %v1339
    %1366 = vmatprep.subr.mxu0 0.0
    %1367 = vmatpush1.msra.mxu0 %v1340
    %1368 = vmatprep.subr.mxu0 0.0
    %1369 = vmatpush1.msra.mxu0 %v1341
    %1370 = vmatprep.subr.mxu0 0.0
    %1371 = vmatpush1.msra.mxu0 %v1342
    %1372 = vmatprep.subr.mxu0 0.0
    %1373 = vmatpush1.msra.mxu0 %v1343
    %1374 = vmatprep.subr.mxu0 0.0
    %1375 = vmatpush1.msra.mxu0 %v1344
    %1376 = vmatprep.subr.mxu0 0.0
    %1377 = vmatpush1.msra.mxu0 %v1345
    %1378 = vmatprep.subr.mxu0 0.0
    %1379 = vmatpush1.msra.mxu0 %v1346
    %1380 = vmatprep.subr.mxu0 0.0
    %1381 = vmatpush1.msra.mxu0 %v1347
    %1382 = vmatprep.subr.mxu0 0.0
    %1383 = vmatpush1.msra.mxu0 %v1348
    %1384 = vmatprep.subr.mxu0 0.0
    %1385 = vmatpush1.msra.mxu0 %v1349
    %1386 = vmatprep.subr.mxu0 0.0
    %1387 = vmatpush1.msra.mxu0 %v1350
    %1388 = vmatprep.subr.mxu0 0.0
    %1389 = vmatpush1.msra.mxu0 %v1351
    %1390 = vmatprep.subr.mxu0 0.0
    %1391 = vmatpush1.msra.mxu0 %v1352
    %1392 = vmatprep.subr.mxu0 0.0
    %1393 = vmatpush1.msra.mxu0 0.0
    %1394 = vmatprep.subr.mxu0 0.0
    %1395 = vmatpush1.msra.mxu0 0.0
    %1396 = vmatprep.subr.mxu0 0.0
    %1397 = vmatpush1.msra.mxu0 0.0
    %1398 = vmatprep.subr.mxu0 0.0
    %1399 = vmatpush1.msra.mxu0 0.0
    %1400 = vmatprep.subr.mxu0 0.0
    %1401 = vmatpush1.msra.mxu0 0.0
    %1402 = vmatprep.subr.mxu0 0.0
    %1403 = vmatpush1.msra.mxu0 0.0
    %1404 = vmatprep.subr.mxu0 0.0
    %1405 = vmatpush1.msra.mxu0 0.0
    %1406 = vmatprep.subr.mxu0 0.0
    %1407 = vmatpush1.msra.mxu0 0.0
    %1408 = vmatprep.subr.mxu0 0.0
    %1409 = vmatpush1.msra.mxu0 0.0
    %1410 = vmatprep.subr.mxu0 0.0
    %1411 = vmatpush1.msra.mxu0 0.0
    %1412 = vmatprep.subr.mxu0 0.0
    %1413 = vmatpush1.msra.mxu0 0.0
    %1414 = vmatprep.subr.mxu0 0.0
    %1415 = vmatpush1.msra.mxu0 0.0
    %1416 = vmatprep.subr.mxu0 0.0
    %1417 = vmatpush1.msra.mxu0 0.0
    %1418 = vmatprep.subr.mxu0 0.0
    %1419 = vmatpush1.msra.mxu0 0.0
    %1420 = vmatprep.subr.mxu0 0.0
    %1421 = vmatpush1.msra.mxu0 0.0
    %1422 = vmatprep.subr.mxu0 0.0
    %1423 = vmatpush1.msra.mxu0 0.0
    %1424 = vmatprep.mubr.f32.mxu0 0.0
    %1425 = vmatmul.mubr.f32.gmra.mrb[0].mxu0 %v1333
    %v1426 = vpop.f32.mrb[0].mxu0
    %v1427 = vadd.f32 %v1358, %v1426
    %v1428 = vpop.f32.mrb[0].mxu0
    %1429 = vdwg.mxu0
    %vm1430 = vcmask 80896
    %1431 = vst.msk [vmem:[#allocation4] sm:$0xff] %vm1430, %v1427
    // Predicated region
    $region38: #{neural_ode_forward.1} parent=1 // pred_check
      _
    $region39: #{neural_ode_forward.1} parent=1 // pred_check_branch
      %1433 = sbr.rel (0) target = $region41
    $region40: #{neural_ode_forward.1} parent=1 // pred_region
      _
    $region41: #{neural_ode_forward.1} parent=1 // pred_fallthru
      _
    // Predicated region
    $region42: #{neural_ode_forward.1} parent=1 // pred_check
      _
    $region43: #{neural_ode_forward.1} parent=1 // pred_check_branch
      %1435 = sbr.rel (0) target = $region45
    $region44: #{neural_ode_forward.1} parent=1 // pred_region
      %s1437 = ssub.s32 128, 128
      %1438 = vsyncadd [#allocation3], %s1437
      %s1440 = sshll.u32 [#allocation2], 4
      %s1441 = int_to_ptr.vmem [resolvable:$true] %s1440
      %1443 = dma.vmem_to_hbm [thread:$0]  %s1441, 128, %s10, [#allocation3]
    $region45: #{neural_ode_forward.1} parent=1 // pred_fallthru
      _
    // Predicated region
    $region46: #{neural_ode_forward.1} parent=1 // pred_check
      _
    $region47: #{neural_ode_forward.1} parent=1 // pred_check_branch
      %1445 = sbr.rel (0) target = $region49
    $region48: #{neural_ode_forward.1} parent=1 // pred_region
      %s1447 = ssub.s32 128, 128
      %1448 = vsyncadd [#allocation5], %s1447
      %s1450 = sshll.u32 [#allocation4], 4
      %s1451 = int_to_ptr.vmem [resolvable:$true] %s1450
      %1453 = dma.vmem_to_hbm [thread:$0]  %s1451, 128, %s11, [#allocation5]
    $region49: #{neural_ode_forward.1} parent=1 // pred_fallthru
      _
    // Predicated region
    $region50: #{neural_ode_forward.1} parent=1 // pred_check
      _
    $region51: #{neural_ode_forward.1} parent=1 // pred_check_branch
      %1455 = sbr.rel (0) target = $region53
    $region52: #{neural_ode_forward.1} parent=1 // pred_region
      _
    $region53: #{neural_ode_forward.1} parent=1 // pred_fallthru
      _
    // Predicated region
    $region54: #{neural_ode_forward.1} parent=1 // pred_check
      _
    $region55: #{neural_ode_forward.1} parent=1 // pred_check_branch
      %1457 = sbr.rel (0) target = $region57
    $region56: #{neural_ode_forward.1} parent=1 // pred_region
      %1458 = dma.done [#allocation3], 128
    $region57: #{neural_ode_forward.1} parent=1 // pred_fallthru
      _
    // Predicated region
    $region58: #{neural_ode_forward.1} parent=1 // pred_check
      _
    $region59: #{neural_ode_forward.1} parent=1 // pred_check_branch
      %1460 = sbr.rel (0) target = $region61
    $region60: #{neural_ode_forward.1} parent=1 // pred_region
      %1461 = dma.done [#allocation5], 128
    $region61: #{neural_ode_forward.1} parent=1 // pred_fallthru
      _
    %1462 = vsyncpa [#allocation3], 1
    %1463 = vsyncpa [#allocation5], 1

</llo_original>
